<compile_context>
chip_gen: v7x
topology: tpu7x:2x2x1
jax: 0.10.0
libtpu: 0.0.40
codegen_flags: <defaults>
</compile_context>

<pallas_src>
import jax
import jax.numpy as jnp
from jax.experimental import pallas as pl
from jax.experimental.pallas import tpu as pltpu


def lstm_kernel(pre_ref, w_hh_ref, h_out_ref):
    """pre_ref: (T, 4*HP) f32 pre-activations (input proj + biases, sigmoid gates pre-scaled 0.5).
    w_hh_ref: (HP, 4*HP) bf16 recurrent weights (row-vector layout, gate-padded, pre-scaled).
    h_out_ref: (1, HP) f32 final hidden state."""
    T = pre_ref.shape[0]
    HP = w_hh_ref.shape[0]          # padded hidden width (one full vreg lane dim)

    w_hh = w_hh_ref[...]            # (HP, 4*HP) bf16, VMEM-resident across the recurrence

    h = jnp.zeros((1, HP), jnp.float32)   # carried in vregs, never round-trips VMEM
    c = jnp.zeros((1, HP), jnp.float32)

    # T is small and static -> fully unrolled recurrence, static slices everywhere.
    for t in range(T):
        gates = pre_ref[t:t + 1, :] + jnp.dot(
            h.astype(jnp.bfloat16), w_hh, preferred_element_type=jnp.float32)   # (1, 4*HP) f32

        tg = jnp.tanh(gates)                        # single EUP launch for all four gates

        # Gate order (PyTorch): [i, f, g, o]; each block is its own 128-lane vreg -> no rotates.
        i_g = 0.5 * tg[:, 0 * HP:1 * HP] + 0.5      # sigmoid via 0.5*tanh(0.5x)+0.5 (exact)
        f_g = 0.5 * tg[:, 1 * HP:2 * HP] + 0.5
        g_g = tg[:, 2 * HP:3 * HP]                  # candidate cell: plain tanh
        o_g = 0.5 * tg[:, 3 * HP:4 * HP] + 0.5

        c = f_g * c + i_g * g_g
        h = o_g * jnp.tanh(c)

    h_out_ref[...] = h              # lane-dense (1, 128) store


def lstm_forward(x, w_ih, w_hh, b_ih, b_hh, w_lin, b_lin):
    """x: (T, I).  w_ih: (4H, I), w_hh: (4H, H), b_*: (4H,), w_lin: (O, H), b_lin: (O,).
    Returns (O,) == predictions[-1] of the PyTorch module."""
    T, _ = x.shape
    H = w_hh.shape[1]
    HP = -(-H // 128) * 128          # pad each gate block to a 128-lane vreg boundary
    G = 4 * HP
    f32 = jnp.float32

    x = x.astype(f32)
    w_ih = w_ih.astype(f32)
    w_hh = w_hh.astype(f32)
    b = (b_ih + b_hh).astype(f32)

    # 0.5 pre-scale on the sigmoid gates (i, f, o) so sigmoid(x) = 0.5*tanh(0.5x)+0.5 needs only
    # a post-affine in-kernel; candidate gate g keeps scale 1.0 (plain tanh).
    gate_scale = jnp.concatenate([
        jnp.full((H,), 0.5, f32), jnp.full((H,), 0.5, f32),
        jnp.ones((H,), f32), jnp.full((H,), 0.5, f32)])          # PyTorch order [i, f, g, o]

    # Input projection + fused biases hoisted out of the kernel (degenerate K=I matmul).
    pre4h = (x @ w_ih.T + b) * gate_scale                        # (T, 4H)
    pre = (jnp.zeros((T, 4, HP), f32)
           .at[:, :, :H].set(pre4h.reshape(T, 4, H))
           .reshape(T, G))                                       # (T, 4*HP), gate-padded

    # Recurrent weights in row-vector layout (H, 4H), gate-padded and bf16 for single-pass MXU.
    w_hh_rv = (w_hh.T * gate_scale).reshape(H, 4, H)             # [k, gate, j] = W_gate[j, k]
    w_hh_p = (jnp.zeros((HP, 4, HP), f32)
              .at[:H, :, :H].set(w_hh_rv)
              .reshape(HP, G)
              .astype(jnp.bfloat16))                             # (HP, 4*HP)

    h_last = pl.pallas_call(
        lstm_kernel,
        out_shape=jax.ShapeDtypeStruct((1, HP), f32),
        # Single invocation (no grid): every operand is resident whole in VMEM (~0.3 MiB total).
        in_specs=[pl.BlockSpec(memory_space=pltpu.MemorySpace.VMEM)] * 2,
        out_specs=pl.BlockSpec(memory_space=pltpu.MemorySpace.VMEM),
    )(pre, w_hh_p)

    # Output Linear (and b_lin) folded outside the kernel: removes the N=1 MXU dot and the
    # 1-lane masked store; this 32-element dot fuses in XLA.
    return w_lin.astype(f32) @ h_last[0, :H] + b_lin.astype(f32)


def lstm_ref(x, w_ih, w_hh, b_ih, b_hh, w_lin, b_lin):
    """Pure-JAX reference mirroring torch.nn.LSTM + Linear semantics (PyTorch gate order)."""
    H = w_hh.shape[1]
    h = jnp.zeros((H,), jnp.float32)
    c = jnp.zeros((H,), jnp.float32)
    for t in range(x.shape[0]):
        g = w_ih @ x[t] + b_ih + w_hh @ h + b_hh
        i = jax.nn.sigmoid(g[0:H])
        f = jax.nn.sigmoid(g[H:2 * H])
        gg = jnp.tanh(g[2 * H:3 * H])
        o = jax.nn.sigmoid(g[3 * H:4 * H])
        c = f * c + i * gg
        h = o * jnp.tanh(c)
    return w_lin @ h + b_lin


if __name__ == "__main__":
    SEQ_LEN = 8
    INPUT_SIZE = 1
    HIDDEN = 32
    OUTPUT_SIZE = 1

    key = jax.random.PRNGKey(0)
    kx, k1, k2, k3, k4, k5, k6 = jax.random.split(key, 7)

    # Deterministic parameter init (uniform +-1/sqrt(H), same scheme as torch default).
    bound = 1.0 / (HIDDEN ** 0.5)
    x = jax.random.normal(kx, (SEQ_LEN, INPUT_SIZE), dtype=jnp.float32)
    w_ih = jax.random.uniform(k1, (4 * HIDDEN, INPUT_SIZE), jnp.float32, -bound, bound)
    w_hh = jax.random.uniform(k2, (4 * HIDDEN, HIDDEN), jnp.float32, -bound, bound)
    b_ih = jax.random.uniform(k3, (4 * HIDDEN,), jnp.float32, -bound, bound)
    b_hh = jax.random.uniform(k4, (4 * HIDDEN,), jnp.float32, -bound, bound)
    w_lin = jax.random.uniform(k5, (OUTPUT_SIZE, HIDDEN), jnp.float32, -bound, bound)
    b_lin = jax.random.uniform(k6, (OUTPUT_SIZE,), jnp.float32, -bound, bound)

    out = lstm_forward(x, w_ih, w_hh, b_ih, b_hh, w_lin, b_lin)
    out = jax.block_until_ready(out)

    ref = lstm_ref(x, w_ih, w_hh, b_ih, b_hh, w_lin, b_lin)
    assert out.shape == (OUTPUT_SIZE,)
    assert jnp.allclose(out, ref, atol=5e-2, rtol=5e-2), (out, ref)

    print("KERNEL_OK")
</pallas_src>

<mosaic_0001>
module attributes {stable_mosaic.version = 11 : i64} {
  func.func @lstm_kernel(%arg0: memref<8x512xf32, #tpu.memory_space<vmem>>, %arg1: memref<128x512xbf16, #tpu.memory_space<vmem>>, %arg2: memref<1x128xf32, #tpu.memory_space<vmem>>) attributes {dimension_semantics = [], scalar_prefetch = 0 : i64, scratch_operands = 0 : i64, tpu.core_type = #tpu.core_type<tc>} {
    %c0 = arith.constant 0 : index
    %c0_0 = arith.constant 0 : index
    %0 = vector.load %arg1[%c0, %c0_0] : memref<128x512xbf16, #tpu.memory_space<vmem>>, vector<128x512xbf16>
    %cst = arith.constant 0.000000e+00 : f32
    %1 = vector.broadcast %cst : f32 to vector<1x128xf32>
    %cst_1 = arith.constant 0.000000e+00 : f32
    %2 = vector.broadcast %cst_1 : f32 to vector<1x128xf32>
    %c0_2 = arith.constant 0 : index
    %c0_3 = arith.constant 0 : index
    %3 = vector.load %arg0[%c0_2, %c0_3] : memref<8x512xf32, #tpu.memory_space<vmem>>, vector<1x512xf32>
    %4 = arith.truncf %1 : vector<1x128xf32> to vector<1x128xbf16>
    %cst_4 = arith.constant dense<0.000000e+00> : vector<1x512xf32>
    %5 = tpu.matmul %4, %0, %cst_4 {dimension_numbers = #tpu.dot_dimension_numbers<[1], [0], [0], [1], [0, 0, 1, 1], [], []>} : vector<1x128xbf16>, vector<128x512xbf16>, vector<1x512xf32> -> vector<1x512xf32>
    %6 = arith.addf %3, %5 : vector<1x512xf32>
    %7 = math.tanh %6 : vector<1x512xf32>
    %8 = vector.extract_strided_slice %7 {offsets = [0, 0], sizes = [1, 128], strides = [1, 1]} : vector<1x512xf32> to vector<1x128xf32>
    %cst_5 = arith.constant 5.000000e-01 : f32
    %9 = vector.broadcast %cst_5 : f32 to vector<1x128xf32>
    %10 = arith.mulf %9, %8 : vector<1x128xf32>
    %cst_6 = arith.constant 5.000000e-01 : f32
    %11 = vector.broadcast %cst_6 : f32 to vector<1x128xf32>
    %12 = arith.addf %10, %11 : vector<1x128xf32>
    %13 = vector.extract_strided_slice %7 {offsets = [0, 128], sizes = [1, 128], strides = [1, 1]} : vector<1x512xf32> to vector<1x128xf32>
    %cst_7 = arith.constant 5.000000e-01 : f32
    %14 = vector.broadcast %cst_7 : f32 to vector<1x128xf32>
    %15 = arith.mulf %14, %13 : vector<1x128xf32>
    %cst_8 = arith.constant 5.000000e-01 : f32
    %16 = vector.broadcast %cst_8 : f32 to vector<1x128xf32>
    %17 = arith.addf %15, %16 : vector<1x128xf32>
    %18 = vector.extract_strided_slice %7 {offsets = [0, 256], sizes = [1, 128], strides = [1, 1]} : vector<1x512xf32> to vector<1x128xf32>
    %19 = vector.extract_strided_slice %7 {offsets = [0, 384], sizes = [1, 128], strides = [1, 1]} : vector<1x512xf32> to vector<1x128xf32>
    %cst_9 = arith.constant 5.000000e-01 : f32
    %20 = vector.broadcast %cst_9 : f32 to vector<1x128xf32>
    %21 = arith.mulf %20, %19 : vector<1x128xf32>
    %cst_10 = arith.constant 5.000000e-01 : f32
    %22 = vector.broadcast %cst_10 : f32 to vector<1x128xf32>
    %23 = arith.addf %21, %22 : vector<1x128xf32>
    %24 = arith.mulf %17, %2 : vector<1x128xf32>
    %25 = arith.mulf %12, %18 : vector<1x128xf32>
    %26 = arith.addf %24, %25 : vector<1x128xf32>
    %27 = math.tanh %26 : vector<1x128xf32>
    %28 = arith.mulf %23, %27 : vector<1x128xf32>
    %c1 = arith.constant 1 : index
    %c0_11 = arith.constant 0 : index
    %29 = vector.load %arg0[%c1, %c0_11] : memref<8x512xf32, #tpu.memory_space<vmem>>, vector<1x512xf32>
    %30 = arith.truncf %28 : vector<1x128xf32> to vector<1x128xbf16>
    %cst_12 = arith.constant dense<0.000000e+00> : vector<1x512xf32>
    %31 = tpu.matmul %30, %0, %cst_12 {dimension_numbers = #tpu.dot_dimension_numbers<[1], [0], [0], [1], [0, 0, 1, 1], [], []>} : vector<1x128xbf16>, vector<128x512xbf16>, vector<1x512xf32> -> vector<1x512xf32>
    %32 = arith.addf %29, %31 : vector<1x512xf32>
    %33 = math.tanh %32 : vector<1x512xf32>
    %34 = vector.extract_strided_slice %33 {offsets = [0, 0], sizes = [1, 128], strides = [1, 1]} : vector<1x512xf32> to vector<1x128xf32>
    %cst_13 = arith.constant 5.000000e-01 : f32
    %35 = vector.broadcast %cst_13 : f32 to vector<1x128xf32>
    %36 = arith.mulf %35, %34 : vector<1x128xf32>
    %cst_14 = arith.constant 5.000000e-01 : f32
    %37 = vector.broadcast %cst_14 : f32 to vector<1x128xf32>
    %38 = arith.addf %36, %37 : vector<1x128xf32>
    %39 = vector.extract_strided_slice %33 {offsets = [0, 128], sizes = [1, 128], strides = [1, 1]} : vector<1x512xf32> to vector<1x128xf32>
    %cst_15 = arith.constant 5.000000e-01 : f32
    %40 = vector.broadcast %cst_15 : f32 to vector<1x128xf32>
    %41 = arith.mulf %40, %39 : vector<1x128xf32>
    %cst_16 = arith.constant 5.000000e-01 : f32
    %42 = vector.broadcast %cst_16 : f32 to vector<1x128xf32>
    %43 = arith.addf %41, %42 : vector<1x128xf32>
    %44 = vector.extract_strided_slice %33 {offsets = [0, 256], sizes = [1, 128], strides = [1, 1]} : vector<1x512xf32> to vector<1x128xf32>
    %45 = vector.extract_strided_slice %33 {offsets = [0, 384], sizes = [1, 128], strides = [1, 1]} : vector<1x512xf32> to vector<1x128xf32>
    %cst_17 = arith.constant 5.000000e-01 : f32
    %46 = vector.broadcast %cst_17 : f32 to vector<1x128xf32>
    %47 = arith.mulf %46, %45 : vector<1x128xf32>
    %cst_18 = arith.constant 5.000000e-01 : f32
    %48 = vector.broadcast %cst_18 : f32 to vector<1x128xf32>
    %49 = arith.addf %47, %48 : vector<1x128xf32>
    %50 = arith.mulf %43, %26 : vector<1x128xf32>
    %51 = arith.mulf %38, %44 : vector<1x128xf32>
    %52 = arith.addf %50, %51 : vector<1x128xf32>
    %53 = math.tanh %52 : vector<1x128xf32>
    %54 = arith.mulf %49, %53 : vector<1x128xf32>
    %c2 = arith.constant 2 : index
    %c0_19 = arith.constant 0 : index
    %55 = vector.load %arg0[%c2, %c0_19] : memref<8x512xf32, #tpu.memory_space<vmem>>, vector<1x512xf32>
    %56 = arith.truncf %54 : vector<1x128xf32> to vector<1x128xbf16>
    %cst_20 = arith.constant dense<0.000000e+00> : vector<1x512xf32>
    %57 = tpu.matmul %56, %0, %cst_20 {dimension_numbers = #tpu.dot_dimension_numbers<[1], [0], [0], [1], [0, 0, 1, 1], [], []>} : vector<1x128xbf16>, vector<128x512xbf16>, vector<1x512xf32> -> vector<1x512xf32>
    %58 = arith.addf %55, %57 : vector<1x512xf32>
    %59 = math.tanh %58 : vector<1x512xf32>
    %60 = vector.extract_strided_slice %59 {offsets = [0, 0], sizes = [1, 128], strides = [1, 1]} : vector<1x512xf32> to vector<1x128xf32>
    %cst_21 = arith.constant 5.000000e-01 : f32
    %61 = vector.broadcast %cst_21 : f32 to vector<1x128xf32>
    %62 = arith.mulf %61, %60 : vector<1x128xf32>
    %cst_22 = arith.constant 5.000000e-01 : f32
    %63 = vector.broadcast %cst_22 : f32 to vector<1x128xf32>
    %64 = arith.addf %62, %63 : vector<1x128xf32>
    %65 = vector.extract_strided_slice %59 {offsets = [0, 128], sizes = [1, 128], strides = [1, 1]} : vector<1x512xf32> to vector<1x128xf32>
    %cst_23 = arith.constant 5.000000e-01 : f32
    %66 = vector.broadcast %cst_23 : f32 to vector<1x128xf32>
    %67 = arith.mulf %66, %65 : vector<1x128xf32>
    %cst_24 = arith.constant 5.000000e-01 : f32
    %68 = vector.broadcast %cst_24 : f32 to vector<1x128xf32>
    %69 = arith.addf %67, %68 : vector<1x128xf32>
    %70 = vector.extract_strided_slice %59 {offsets = [0, 256], sizes = [1, 128], strides = [1, 1]} : vector<1x512xf32> to vector<1x128xf32>
    %71 = vector.extract_strided_slice %59 {offsets = [0, 384], sizes = [1, 128], strides = [1, 1]} : vector<1x512xf32> to vector<1x128xf32>
    %cst_25 = arith.constant 5.000000e-01 : f32
    %72 = vector.broadcast %cst_25 : f32 to vector<1x128xf32>
    %73 = arith.mulf %72, %71 : vector<1x128xf32>
    %cst_26 = arith.constant 5.000000e-01 : f32
    %74 = vector.broadcast %cst_26 : f32 to vector<1x128xf32>
    %75 = arith.addf %73, %74 : vector<1x128xf32>
    %76 = arith.mulf %69, %52 : vector<1x128xf32>
    %77 = arith.mulf %64, %70 : vector<1x128xf32>
    %78 = arith.addf %76, %77 : vector<1x128xf32>
    %79 = math.tanh %78 : vector<1x128xf32>
    %80 = arith.mulf %75, %79 : vector<1x128xf32>
    %c3 = arith.constant 3 : index
    %c0_27 = arith.constant 0 : index
    %81 = vector.load %arg0[%c3, %c0_27] : memref<8x512xf32, #tpu.memory_space<vmem>>, vector<1x512xf32>
    %82 = arith.truncf %80 : vector<1x128xf32> to vector<1x128xbf16>
    %cst_28 = arith.constant dense<0.000000e+00> : vector<1x512xf32>
    %83 = tpu.matmul %82, %0, %cst_28 {dimension_numbers = #tpu.dot_dimension_numbers<[1], [0], [0], [1], [0, 0, 1, 1], [], []>} : vector<1x128xbf16>, vector<128x512xbf16>, vector<1x512xf32> -> vector<1x512xf32>
    %84 = arith.addf %81, %83 : vector<1x512xf32>
    %85 = math.tanh %84 : vector<1x512xf32>
    %86 = vector.extract_strided_slice %85 {offsets = [0, 0], sizes = [1, 128], strides = [1, 1]} : vector<1x512xf32> to vector<1x128xf32>
    %cst_29 = arith.constant 5.000000e-01 : f32
    %87 = vector.broadcast %cst_29 : f32 to vector<1x128xf32>
    %88 = arith.mulf %87, %86 : vector<1x128xf32>
    %cst_30 = arith.constant 5.000000e-01 : f32
    %89 = vector.broadcast %cst_30 : f32 to vector<1x128xf32>
    %90 = arith.addf %88, %89 : vector<1x128xf32>
    %91 = vector.extract_strided_slice %85 {offsets = [0, 128], sizes = [1, 128], strides = [1, 1]} : vector<1x512xf32> to vector<1x128xf32>
    %cst_31 = arith.constant 5.000000e-01 : f32
    %92 = vector.broadcast %cst_31 : f32 to vector<1x128xf32>
    %93 = arith.mulf %92, %91 : vector<1x128xf32>
    %cst_32 = arith.constant 5.000000e-01 : f32
    %94 = vector.broadcast %cst_32 : f32 to vector<1x128xf32>
    %95 = arith.addf %93, %94 : vector<1x128xf32>
    %96 = vector.extract_strided_slice %85 {offsets = [0, 256], sizes = [1, 128], strides = [1, 1]} : vector<1x512xf32> to vector<1x128xf32>
    %97 = vector.extract_strided_slice %85 {offsets = [0, 384], sizes = [1, 128], strides = [1, 1]} : vector<1x512xf32> to vector<1x128xf32>
    %cst_33 = arith.constant 5.000000e-01 : f32
    %98 = vector.broadcast %cst_33 : f32 to vector<1x128xf32>
    %99 = arith.mulf %98, %97 : vector<1x128xf32>
    %cst_34 = arith.constant 5.000000e-01 : f32
    %100 = vector.broadcast %cst_34 : f32 to vector<1x128xf32>
    %101 = arith.addf %99, %100 : vector<1x128xf32>
    %102 = arith.mulf %95, %78 : vector<1x128xf32>
    %103 = arith.mulf %90, %96 : vector<1x128xf32>
    %104 = arith.addf %102, %103 : vector<1x128xf32>
    %105 = math.tanh %104 : vector<1x128xf32>
    %106 = arith.mulf %101, %105 : vector<1x128xf32>
    %c4 = arith.constant 4 : index
    %c0_35 = arith.constant 0 : index
    %107 = vector.load %arg0[%c4, %c0_35] : memref<8x512xf32, #tpu.memory_space<vmem>>, vector<1x512xf32>
    %108 = arith.truncf %106 : vector<1x128xf32> to vector<1x128xbf16>
    %cst_36 = arith.constant dense<0.000000e+00> : vector<1x512xf32>
    %109 = tpu.matmul %108, %0, %cst_36 {dimension_numbers = #tpu.dot_dimension_numbers<[1], [0], [0], [1], [0, 0, 1, 1], [], []>} : vector<1x128xbf16>, vector<128x512xbf16>, vector<1x512xf32> -> vector<1x512xf32>
    %110 = arith.addf %107, %109 : vector<1x512xf32>
    %111 = math.tanh %110 : vector<1x512xf32>
    %112 = vector.extract_strided_slice %111 {offsets = [0, 0], sizes = [1, 128], strides = [1, 1]} : vector<1x512xf32> to vector<1x128xf32>
    %cst_37 = arith.constant 5.000000e-01 : f32
    %113 = vector.broadcast %cst_37 : f32 to vector<1x128xf32>
    %114 = arith.mulf %113, %112 : vector<1x128xf32>
    %cst_38 = arith.constant 5.000000e-01 : f32
    %115 = vector.broadcast %cst_38 : f32 to vector<1x128xf32>
    %116 = arith.addf %114, %115 : vector<1x128xf32>
    %117 = vector.extract_strided_slice %111 {offsets = [0, 128], sizes = [1, 128], strides = [1, 1]} : vector<1x512xf32> to vector<1x128xf32>
    %cst_39 = arith.constant 5.000000e-01 : f32
    %118 = vector.broadcast %cst_39 : f32 to vector<1x128xf32>
    %119 = arith.mulf %118, %117 : vector<1x128xf32>
    %cst_40 = arith.constant 5.000000e-01 : f32
    %120 = vector.broadcast %cst_40 : f32 to vector<1x128xf32>
    %121 = arith.addf %119, %120 : vector<1x128xf32>
    %122 = vector.extract_strided_slice %111 {offsets = [0, 256], sizes = [1, 128], strides = [1, 1]} : vector<1x512xf32> to vector<1x128xf32>
    %123 = vector.extract_strided_slice %111 {offsets = [0, 384], sizes = [1, 128], strides = [1, 1]} : vector<1x512xf32> to vector<1x128xf32>
    %cst_41 = arith.constant 5.000000e-01 : f32
    %124 = vector.broadcast %cst_41 : f32 to vector<1x128xf32>
    %125 = arith.mulf %124, %123 : vector<1x128xf32>
    %cst_42 = arith.constant 5.000000e-01 : f32
    %126 = vector.broadcast %cst_42 : f32 to vector<1x128xf32>
    %127 = arith.addf %125, %126 : vector<1x128xf32>
    %128 = arith.mulf %121, %104 : vector<1x128xf32>
    %129 = arith.mulf %116, %122 : vector<1x128xf32>
    %130 = arith.addf %128, %129 : vector<1x128xf32>
    %131 = math.tanh %130 : vector<1x128xf32>
    %132 = arith.mulf %127, %131 : vector<1x128xf32>
    %c5 = arith.constant 5 : index
    %c0_43 = arith.constant 0 : index
    %133 = vector.load %arg0[%c5, %c0_43] : memref<8x512xf32, #tpu.memory_space<vmem>>, vector<1x512xf32>
    %134 = arith.truncf %132 : vector<1x128xf32> to vector<1x128xbf16>
    %cst_44 = arith.constant dense<0.000000e+00> : vector<1x512xf32>
    %135 = tpu.matmul %134, %0, %cst_44 {dimension_numbers = #tpu.dot_dimension_numbers<[1], [0], [0], [1], [0, 0, 1, 1], [], []>} : vector<1x128xbf16>, vector<128x512xbf16>, vector<1x512xf32> -> vector<1x512xf32>
    %136 = arith.addf %133, %135 : vector<1x512xf32>
    %137 = math.tanh %136 : vector<1x512xf32>
    %138 = vector.extract_strided_slice %137 {offsets = [0, 0], sizes = [1, 128], strides = [1, 1]} : vector<1x512xf32> to vector<1x128xf32>
    %cst_45 = arith.constant 5.000000e-01 : f32
    %139 = vector.broadcast %cst_45 : f32 to vector<1x128xf32>
    %140 = arith.mulf %139, %138 : vector<1x128xf32>
    %cst_46 = arith.constant 5.000000e-01 : f32
    %141 = vector.broadcast %cst_46 : f32 to vector<1x128xf32>
    %142 = arith.addf %140, %141 : vector<1x128xf32>
    %143 = vector.extract_strided_slice %137 {offsets = [0, 128], sizes = [1, 128], strides = [1, 1]} : vector<1x512xf32> to vector<1x128xf32>
    %cst_47 = arith.constant 5.000000e-01 : f32
    %144 = vector.broadcast %cst_47 : f32 to vector<1x128xf32>
    %145 = arith.mulf %144, %143 : vector<1x128xf32>
    %cst_48 = arith.constant 5.000000e-01 : f32
    %146 = vector.broadcast %cst_48 : f32 to vector<1x128xf32>
    %147 = arith.addf %145, %146 : vector<1x128xf32>
    %148 = vector.extract_strided_slice %137 {offsets = [0, 256], sizes = [1, 128], strides = [1, 1]} : vector<1x512xf32> to vector<1x128xf32>
    %149 = vector.extract_strided_slice %137 {offsets = [0, 384], sizes = [1, 128], strides = [1, 1]} : vector<1x512xf32> to vector<1x128xf32>
    %cst_49 = arith.constant 5.000000e-01 : f32
    %150 = vector.broadcast %cst_49 : f32 to vector<1x128xf32>
    %151 = arith.mulf %150, %149 : vector<1x128xf32>
    %cst_50 = arith.constant 5.000000e-01 : f32
    %152 = vector.broadcast %cst_50 : f32 to vector<1x128xf32>
    %153 = arith.addf %151, %152 : vector<1x128xf32>
    %154 = arith.mulf %147, %130 : vector<1x128xf32>
    %155 = arith.mulf %142, %148 : vector<1x128xf32>
    %156 = arith.addf %154, %155 : vector<1x128xf32>
    %157 = math.tanh %156 : vector<1x128xf32>
    %158 = arith.mulf %153, %157 : vector<1x128xf32>
    %c6 = arith.constant 6 : index
    %c0_51 = arith.constant 0 : index
    %159 = vector.load %arg0[%c6, %c0_51] : memref<8x512xf32, #tpu.memory_space<vmem>>, vector<1x512xf32>
    %160 = arith.truncf %158 : vector<1x128xf32> to vector<1x128xbf16>
    %cst_52 = arith.constant dense<0.000000e+00> : vector<1x512xf32>
    %161 = tpu.matmul %160, %0, %cst_52 {dimension_numbers = #tpu.dot_dimension_numbers<[1], [0], [0], [1], [0, 0, 1, 1], [], []>} : vector<1x128xbf16>, vector<128x512xbf16>, vector<1x512xf32> -> vector<1x512xf32>
    %162 = arith.addf %159, %161 : vector<1x512xf32>
    %163 = math.tanh %162 : vector<1x512xf32>
    %164 = vector.extract_strided_slice %163 {offsets = [0, 0], sizes = [1, 128], strides = [1, 1]} : vector<1x512xf32> to vector<1x128xf32>
    %cst_53 = arith.constant 5.000000e-01 : f32
    %165 = vector.broadcast %cst_53 : f32 to vector<1x128xf32>
    %166 = arith.mulf %165, %164 : vector<1x128xf32>
    %cst_54 = arith.constant 5.000000e-01 : f32
    %167 = vector.broadcast %cst_54 : f32 to vector<1x128xf32>
    %168 = arith.addf %166, %167 : vector<1x128xf32>
    %169 = vector.extract_strided_slice %163 {offsets = [0, 128], sizes = [1, 128], strides = [1, 1]} : vector<1x512xf32> to vector<1x128xf32>
    %cst_55 = arith.constant 5.000000e-01 : f32
    %170 = vector.broadcast %cst_55 : f32 to vector<1x128xf32>
    %171 = arith.mulf %170, %169 : vector<1x128xf32>
    %cst_56 = arith.constant 5.000000e-01 : f32
    %172 = vector.broadcast %cst_56 : f32 to vector<1x128xf32>
    %173 = arith.addf %171, %172 : vector<1x128xf32>
    %174 = vector.extract_strided_slice %163 {offsets = [0, 256], sizes = [1, 128], strides = [1, 1]} : vector<1x512xf32> to vector<1x128xf32>
    %175 = vector.extract_strided_slice %163 {offsets = [0, 384], sizes = [1, 128], strides = [1, 1]} : vector<1x512xf32> to vector<1x128xf32>
    %cst_57 = arith.constant 5.000000e-01 : f32
    %176 = vector.broadcast %cst_57 : f32 to vector<1x128xf32>
    %177 = arith.mulf %176, %175 : vector<1x128xf32>
    %cst_58 = arith.constant 5.000000e-01 : f32
    %178 = vector.broadcast %cst_58 : f32 to vector<1x128xf32>
    %179 = arith.addf %177, %178 : vector<1x128xf32>
    %180 = arith.mulf %173, %156 : vector<1x128xf32>
    %181 = arith.mulf %168, %174 : vector<1x128xf32>
    %182 = arith.addf %180, %181 : vector<1x128xf32>
    %183 = math.tanh %182 : vector<1x128xf32>
    %184 = arith.mulf %179, %183 : vector<1x128xf32>
    %c7 = arith.constant 7 : index
    %c0_59 = arith.constant 0 : index
    %185 = vector.load %arg0[%c7, %c0_59] : memref<8x512xf32, #tpu.memory_space<vmem>>, vector<1x512xf32>
    %186 = arith.truncf %184 : vector<1x128xf32> to vector<1x128xbf16>
    %cst_60 = arith.constant dense<0.000000e+00> : vector<1x512xf32>
    %187 = tpu.matmul %186, %0, %cst_60 {dimension_numbers = #tpu.dot_dimension_numbers<[1], [0], [0], [1], [0, 0, 1, 1], [], []>} : vector<1x128xbf16>, vector<128x512xbf16>, vector<1x512xf32> -> vector<1x512xf32>
    %188 = arith.addf %185, %187 : vector<1x512xf32>
    %189 = math.tanh %188 : vector<1x512xf32>
    %190 = vector.extract_strided_slice %189 {offsets = [0, 0], sizes = [1, 128], strides = [1, 1]} : vector<1x512xf32> to vector<1x128xf32>
    %cst_61 = arith.constant 5.000000e-01 : f32
    %191 = vector.broadcast %cst_61 : f32 to vector<1x128xf32>
    %192 = arith.mulf %191, %190 : vector<1x128xf32>
    %cst_62 = arith.constant 5.000000e-01 : f32
    %193 = vector.broadcast %cst_62 : f32 to vector<1x128xf32>
    %194 = arith.addf %192, %193 : vector<1x128xf32>
    %195 = vector.extract_strided_slice %189 {offsets = [0, 128], sizes = [1, 128], strides = [1, 1]} : vector<1x512xf32> to vector<1x128xf32>
    %cst_63 = arith.constant 5.000000e-01 : f32
    %196 = vector.broadcast %cst_63 : f32 to vector<1x128xf32>
    %197 = arith.mulf %196, %195 : vector<1x128xf32>
    %cst_64 = arith.constant 5.000000e-01 : f32
    %198 = vector.broadcast %cst_64 : f32 to vector<1x128xf32>
    %199 = arith.addf %197, %198 : vector<1x128xf32>
    %200 = vector.extract_strided_slice %189 {offsets = [0, 256], sizes = [1, 128], strides = [1, 1]} : vector<1x512xf32> to vector<1x128xf32>
    %201 = vector.extract_strided_slice %189 {offsets = [0, 384], sizes = [1, 128], strides = [1, 1]} : vector<1x512xf32> to vector<1x128xf32>
    %cst_65 = arith.constant 5.000000e-01 : f32
    %202 = vector.broadcast %cst_65 : f32 to vector<1x128xf32>
    %203 = arith.mulf %202, %201 : vector<1x128xf32>
    %cst_66 = arith.constant 5.000000e-01 : f32
    %204 = vector.broadcast %cst_66 : f32 to vector<1x128xf32>
    %205 = arith.addf %203, %204 : vector<1x128xf32>
    %206 = arith.mulf %199, %182 : vector<1x128xf32>
    %207 = arith.mulf %194, %200 : vector<1x128xf32>
    %208 = arith.addf %206, %207 : vector<1x128xf32>
    %209 = math.tanh %208 : vector<1x128xf32>
    %210 = arith.mulf %205, %209 : vector<1x128xf32>
    %c0_67 = arith.constant 0 : index
    %c0_68 = arith.constant 0 : index
    %211 = vector.load %arg2[%c0_67, %c0_68] : memref<1x128xf32, #tpu.memory_space<vmem>>, vector<1x128xf32>
    tpu.vector_store %arg2[%c0_67, %c0_68], %210 {strides = array<i32>} : memref<1x128xf32, #tpu.memory_space<vmem>>, vector<1x128xf32>,
    return
  }
}

</mosaic_0001>

<llo_original>
// kernel: tpu_custom_call.1
$region0: #{tpu_custom_call.1}
  #allocation0 [shape = 'u32[]', space=smem, size = 0x4, offset = 0x4, fixed_abs, tag = 'smem constant byte address 0x4 - core index']
  #allocation1 [shape = 'u32[144,128]{1,0:T(1,128)}', space=vmem, size = 0x12000, scoped, tag = 'internal scratch']
  %s0 = inlined_call_operand.hbm [shape: f32[8,512], index: 0, kind: input, shape index: {}]
  %s1 = inlined_call_operand.hbm [shape: bf16[128,512], index: 1, kind: input, shape index: {}]
  %s2 = inlined_call_operand.hbm [shape: f32[1,128], index: 2, kind: output, shape index: {}]
  %s3 = sld [smem:[#allocation0]]
  $region26: #{tpu_custom_call.1} parent=0
    _
  %s5 = ssub.s32 1, %s3
  %s6 = scalar_select 0, %s5, %s3
  $region1: #{tpu_custom_call.1} parent=0
    #allocation2 [shape = 'u8[16384]{0}', space=vmem, size = 0x4000, scoped, tag = 'input window, operand 0, single buffered']
    #allocation3 [shape = 's32[1]{0}', space=sflag, size = 0x4, scoped, tag = 'scoped memory for tpu_custom_call.1']
    #allocation4 [shape = 's32[1]{0}', space=sflag, size = 0x4, scoped, tag = 'scoped memory for tpu_custom_call.1']
    #allocation5 [shape = 'u8[131072]{0}', space=vmem, size = 0x20000, scoped, tag = 'input window, operand 1, single buffered']
    #allocation6 [shape = 's32[1]{0}', space=sflag, size = 0x4, scoped, tag = 'scoped memory for tpu_custom_call.1']
    #allocation7 [shape = 'u8[512]{0}', space=vmem, size = 0x400, scoped, tag = 'output window, operand 0, single buffered']
    %7 = vsyncpa [#allocation3], 0
    %8 = vsyncpa [#allocation6], 0
    %9 = vsyncpa [#allocation4], 0
    // Predicated region
    $region2: #{tpu_custom_call.1} parent=1 // pred_check
      _
    $region3: #{tpu_custom_call.1} parent=1 // pred_check_branch
      %11 = sbr.rel (0) target = $region5
    $region4: #{tpu_custom_call.1} parent=1 // pred_region
      %s13 = ssub.s32 512, 512
      %14 = vsyncadd [#allocation3], %s13
      %s16 = sshll.u32 [#allocation2], 4
      %s17 = int_to_ptr.vmem [resolvable:$true] %s16
      %19 = dma.hbm_to_vmem [thread:$0]  %s0, 512, %s17, [#allocation3]
    $region5: #{tpu_custom_call.1} parent=1 // pred_fallthru
      _
    // Predicated region
    $region6: #{tpu_custom_call.1} parent=1 // pred_check
      _
    $region7: #{tpu_custom_call.1} parent=1 // pred_check_branch
      %21 = sbr.rel (0) target = $region9
    $region8: #{tpu_custom_call.1} parent=1 // pred_region
      %s23 = ssub.s32 4096, 4096
      %24 = vsyncadd [#allocation6], %s23
      %s25 = sshll.u32 [#allocation5], 4
      %s26 = int_to_ptr.vmem [resolvable:$true] %s25
      %31 = dma.hbm_to_vmem [thread:$0]  %s1, 4096, %s26, [#allocation6], 256, 256, 16
    $region9: #{tpu_custom_call.1} parent=1 // pred_fallthru
      _
    // Predicated region
    $region10: #{tpu_custom_call.1} parent=1 // pred_check
      _
    $region11: #{tpu_custom_call.1} parent=1 // pred_check_branch
      %33 = sbr.rel (0) target = $region13
    $region12: #{tpu_custom_call.1} parent=1 // pred_region
      %34 = dma.done [#allocation3], 512
    $region13: #{tpu_custom_call.1} parent=1 // pred_fallthru
      _
    // Predicated region
    $region14: #{tpu_custom_call.1} parent=1 // pred_check
      _
    $region15: #{tpu_custom_call.1} parent=1 // pred_check_branch
      %36 = sbr.rel (0) target = $region17
    $region16: #{tpu_custom_call.1} parent=1 // pred_region
      %37 = dma.done [#allocation6], 4096
    $region17: #{tpu_custom_call.1} parent=1 // pred_fallthru
      _
    %v39 = vld [vmem:[#allocation5] sm:$0xff]
    %v40 = vld [vmem:[#allocation5 + $0x8] sm:$0xff]
    %v41 = vld [vmem:[#allocation5 + $0x10] sm:$0xff]
    %v42 = vld [vmem:[#allocation5 + $0x18] sm:$0xff]
    %v43 = vld [vmem:[#allocation5 + $0x20] sm:$0xff]
    %v44 = vld [vmem:[#allocation5 + $0x28] sm:$0xff]
    %v45 = vld [vmem:[#allocation5 + $0x30] sm:$0xff]
    %v46 = vld [vmem:[#allocation5 + $0x38] sm:$0xff]
    %v47 = vld [vmem:[#allocation5 + $0x40] sm:$0xff]
    %v48 = vld [vmem:[#allocation5 + $0x48] sm:$0xff]
    %v49 = vld [vmem:[#allocation5 + $0x50] sm:$0xff]
    %v50 = vld [vmem:[#allocation5 + $0x58] sm:$0xff]
    %v51 = vld [vmem:[#allocation5 + $0x60] sm:$0xff]
    %v52 = vld [vmem:[#allocation5 + $0x68] sm:$0xff]
    %v53 = vld [vmem:[#allocation5 + $0x70] sm:$0xff]
    %v54 = vld [vmem:[#allocation5 + $0x78] sm:$0xff]
    %v55 = vld [vmem:[#allocation5 + $0x80] sm:$0xff]
    %v56 = vld [vmem:[#allocation5 + $0x88] sm:$0xff]
    %v57 = vld [vmem:[#allocation5 + $0x90] sm:$0xff]
    %v58 = vld [vmem:[#allocation5 + $0x98] sm:$0xff]
    %v59 = vld [vmem:[#allocation5 + $0xa0] sm:$0xff]
    %v60 = vld [vmem:[#allocation5 + $0xa8] sm:$0xff]
    %v61 = vld [vmem:[#allocation5 + $0xb0] sm:$0xff]
    %v62 = vld [vmem:[#allocation5 + $0xb8] sm:$0xff]
    %v63 = vld [vmem:[#allocation5 + $0xc0] sm:$0xff]
    %v64 = vld [vmem:[#allocation5 + $0xc8] sm:$0xff]
    %v65 = vld [vmem:[#allocation5 + $0xd0] sm:$0xff]
    %v66 = vld [vmem:[#allocation5 + $0xd8] sm:$0xff]
    %v67 = vld [vmem:[#allocation5 + $0xe0] sm:$0xff]
    %v68 = vld [vmem:[#allocation5 + $0xe8] sm:$0xff]
    %v69 = vld [vmem:[#allocation5 + $0xf0] sm:$0xff]
    %v70 = vld [vmem:[#allocation5 + $0xf8] sm:$0xff]
    %v71 = vld [vmem:[#allocation2] ss:$8 sm:$0xf]
    %v104 = vunpack.c.l.b16 %v39
    %v105 = vunpack.c.h.b16 %v39
    %v106 = vunpack.c.l.b16 %v40
    %v107 = vunpack.c.h.b16 %v40
    %v108 = vunpack.c.l.b16 %v41
    %v109 = vunpack.c.h.b16 %v41
    %v110 = vunpack.c.l.b16 %v42
    %v111 = vunpack.c.h.b16 %v42
    %v112 = vunpack.c.l.b16 %v43
    %v113 = vunpack.c.h.b16 %v43
    %v114 = vunpack.c.l.b16 %v44
    %v115 = vunpack.c.h.b16 %v44
    %v116 = vunpack.c.l.b16 %v45
    %v117 = vunpack.c.h.b16 %v45
    %v118 = vunpack.c.l.b16 %v46
    %v119 = vunpack.c.h.b16 %v46
    %v120 = vunpack.c.l.b16 %v47
    %v121 = vunpack.c.h.b16 %v47
    %v122 = vunpack.c.l.b16 %v48
    %v123 = vunpack.c.h.b16 %v48
    %v124 = vunpack.c.l.b16 %v49
    %v125 = vunpack.c.h.b16 %v49
    %v126 = vunpack.c.l.b16 %v50
    %v127 = vunpack.c.h.b16 %v50
    %v128 = vunpack.c.l.b16 %v51
    %v129 = vunpack.c.h.b16 %v51
    %v130 = vunpack.c.l.b16 %v52
    %v131 = vunpack.c.h.b16 %v52
    %v132 = vunpack.c.l.b16 %v53
    %v133 = vunpack.c.h.b16 %v53
    %v134 = vunpack.c.l.b16 %v54
    %v135 = vunpack.c.h.b16 %v54
    %v136 = vunpack.c.l.b16 %v55
    %v137 = vunpack.c.h.b16 %v55
    %v138 = vunpack.c.l.b16 %v56
    %v139 = vunpack.c.h.b16 %v56
    %v140 = vunpack.c.l.b16 %v57
    %v141 = vunpack.c.h.b16 %v57
    %v142 = vunpack.c.l.b16 %v58
    %v143 = vunpack.c.h.b16 %v58
    %v144 = vunpack.c.l.b16 %v59
    %v145 = vunpack.c.h.b16 %v59
    %v146 = vunpack.c.l.b16 %v60
    %v147 = vunpack.c.h.b16 %v60
    %v148 = vunpack.c.l.b16 %v61
    %v149 = vunpack.c.h.b16 %v61
    %v150 = vunpack.c.l.b16 %v62
    %v151 = vunpack.c.h.b16 %v62
    %v152 = vunpack.c.l.b16 %v63
    %v153 = vunpack.c.h.b16 %v63
    %v154 = vunpack.c.l.b16 %v64
    %v155 = vunpack.c.h.b16 %v64
    %v156 = vunpack.c.l.b16 %v65
    %v157 = vunpack.c.h.b16 %v65
    %v158 = vunpack.c.l.b16 %v66
    %v159 = vunpack.c.h.b16 %v66
    %v160 = vunpack.c.l.b16 %v67
    %v161 = vunpack.c.h.b16 %v67
    %v162 = vunpack.c.l.b16 %v68
    %v163 = vunpack.c.h.b16 %v68
    %v164 = vunpack.c.l.b16 %v69
    %v165 = vunpack.c.h.b16 %v69
    %v166 = vunpack.c.l.b16 %v70
    %v167 = vunpack.c.h.b16 %v70
    %v168 = vpack.c.b16 %v108, %v104
    %v169 = vpack.c.b16 %v109, %v105
    %v170 = vpack.c.b16 %v110, %v106
    %v171 = vpack.c.b16 %v111, %v107
    %v172 = vpack.c.b16 %v116, %v112
    %v173 = vpack.c.b16 %v117, %v113
    %v174 = vpack.c.b16 %v118, %v114
    %v175 = vpack.c.b16 %v119, %v115
    %v176 = vpack.c.b16 %v124, %v120
    %v177 = vpack.c.b16 %v125, %v121
    %v178 = vpack.c.b16 %v126, %v122
    %v179 = vpack.c.b16 %v127, %v123
    %v180 = vpack.c.b16 %v132, %v128
    %v181 = vpack.c.b16 %v133, %v129
    %v182 = vpack.c.b16 %v134, %v130
    %v183 = vpack.c.b16 %v135, %v131
    %v184 = vpack.c.b16 %v140, %v136
    %v185 = vpack.c.b16 %v141, %v137
    %v186 = vpack.c.b16 %v142, %v138
    %v187 = vpack.c.b16 %v143, %v139
    %v188 = vpack.c.b16 %v148, %v144
    %v189 = vpack.c.b16 %v149, %v145
    %v190 = vpack.c.b16 %v150, %v146
    %v191 = vpack.c.b16 %v151, %v147
    %v192 = vpack.c.b16 %v156, %v152
    %v193 = vpack.c.b16 %v157, %v153
    %v194 = vpack.c.b16 %v158, %v154
    %v195 = vpack.c.b16 %v159, %v155
    %v196 = vpack.c.b16 %v164, %v160
    %v197 = vpack.c.b16 %v165, %v161
    %v198 = vpack.c.b16 %v166, %v162
    %v199 = vpack.c.b16 %v167, %v163
    %232 = vmatprep.subr.bf16.mxu0 %v169
    %233 = vmatpush1.bf16.msra.mxu0 %v168
    %234 = vmatprep.subr.bf16.mxu0 %v173
    %235 = vmatpush1.bf16.msra.mxu0 %v172
    %236 = vmatprep.subr.bf16.mxu0 %v177
    %237 = vmatpush1.bf16.msra.mxu0 %v176
    %238 = vmatprep.subr.bf16.mxu0 %v181
    %239 = vmatpush1.bf16.msra.mxu0 %v180
    %240 = vmatprep.subr.bf16.mxu0 %v185
    %241 = vmatpush1.bf16.msra.mxu0 %v184
    %242 = vmatprep.subr.bf16.mxu0 %v189
    %243 = vmatpush1.bf16.msra.mxu0 %v188
    %244 = vmatprep.subr.bf16.mxu0 %v193
    %245 = vmatpush1.bf16.msra.mxu0 %v192
    %246 = vmatprep.subr.bf16.mxu0 %v197
    %247 = vmatpush1.bf16.msra.mxu0 %v196
    %248 = vmatprep.subr.bf16.mxu0 0
    %249 = vmatpush1.bf16.msra.mxu0 0
    %250 = vmatprep.subr.bf16.mxu0 0
    %251 = vmatpush1.bf16.msra.mxu0 0
    %252 = vmatprep.subr.bf16.mxu0 0
    %253 = vmatpush1.bf16.msra.mxu0 0
    %254 = vmatprep.subr.bf16.mxu0 0
    %255 = vmatpush1.bf16.msra.mxu0 0
    %256 = vmatprep.subr.bf16.mxu0 0
    %257 = vmatpush1.bf16.msra.mxu0 0
    %258 = vmatprep.subr.bf16.mxu0 0
    %259 = vmatpush1.bf16.msra.mxu0 0
    %260 = vmatprep.subr.bf16.mxu0 0
    %261 = vmatpush1.bf16.msra.mxu0 0
    %262 = vmatprep.subr.bf16.mxu0 0
    %263 = vmatpush1.bf16.msra.mxu0 0
    %264 = vmatprep.mubr.bf16.mxu0 0
    %265 = vmatmul.mubr.bf16.gmra.mrb[0].mxu0 0
    %v266 = vpop.f32.mrb[0].mxu0
    %v267 = vadd.f32 0.0, %v266
    %v268 = vpop.f32.mrb[0].mxu0
    %v269 = vadd.f32 0.0, %v268
    %v270 = vpop.f32.mrb[0].mxu0
    %v271 = vpop.f32.mrb[0].mxu0
    %272 = vdwg.mxu0
    %273 = vmatprep.subr.bf16.mxu0 %v171
    %274 = vmatpush1.bf16.msra.mxu0 %v170
    %275 = vmatprep.subr.bf16.mxu0 %v175
    %276 = vmatpush1.bf16.msra.mxu0 %v174
    %277 = vmatprep.subr.bf16.mxu0 %v179
    %278 = vmatpush1.bf16.msra.mxu0 %v178
    %279 = vmatprep.subr.bf16.mxu0 %v183
    %280 = vmatpush1.bf16.msra.mxu0 %v182
    %281 = vmatprep.subr.bf16.mxu0 %v187
    %282 = vmatpush1.bf16.msra.mxu0 %v186
    %283 = vmatprep.subr.bf16.mxu0 %v191
    %284 = vmatpush1.bf16.msra.mxu0 %v190
    %285 = vmatprep.subr.bf16.mxu0 %v195
    %286 = vmatpush1.bf16.msra.mxu0 %v194
    %287 = vmatprep.subr.bf16.mxu0 %v199
    %288 = vmatpush1.bf16.msra.mxu0 %v198
    %289 = vmatprep.subr.bf16.mxu0 0
    %290 = vmatpush1.bf16.msra.mxu0 0
    %291 = vmatprep.subr.bf16.mxu0 0
    %292 = vmatpush1.bf16.msra.mxu0 0
    %293 = vmatprep.subr.bf16.mxu0 0
    %294 = vmatpush1.bf16.msra.mxu0 0
    %295 = vmatprep.subr.bf16.mxu0 0
    %296 = vmatpush1.bf16.msra.mxu0 0
    %297 = vmatprep.subr.bf16.mxu0 0
    %298 = vmatpush1.bf16.msra.mxu0 0
    %299 = vmatprep.subr.bf16.mxu0 0
    %300 = vmatpush1.bf16.msra.mxu0 0
    %301 = vmatprep.subr.bf16.mxu0 0
    %302 = vmatpush1.bf16.msra.mxu0 0
    %303 = vmatprep.subr.bf16.mxu0 0
    %304 = vmatpush1.bf16.msra.mxu0 0
    %305 = vmatprep.mubr.bf16.mxu0 0
    %306 = vmatmul.mubr.bf16.gmra.mrb[0].mxu0 0
    %v307 = vpop.f32.mrb[0].mxu0
    %v308 = vadd.f32 0.0, %v307
    %v309 = vpop.f32.mrb[0].mxu0
    %v310 = vadd.f32 0.0, %v309
    %v311 = vpop.f32.mrb[0].mxu0
    %v312 = vpop.f32.mrb[0].mxu0
    %313 = vdwg.mxu0
    %v318 = vcombine.low %v267, %v269
    %v319 = vcombine.low %v308, %v310
    %v321 = vunpack.c.l.s4 1966171168
    %v322 = vunpack.c.0.s8 %v321
    %v323 = vlaneseq
    %v324 = vshrl.u32 %v323, 7
    %v325 = vsub.s32 %v322, %v324
    %v326 = vrot.slane %v318, %v325
    %v328 = vunpack.c.l.s4 1966171168
    %v329 = vunpack.c.0.s8 %v328
    %v330 = vlaneseq
    %v331 = vshrl.u32 %v330, 7
    %v332 = vsub.s32 %v329, %v331
    %v333 = vrot.slane %v319, %v332
    %v334 = vcombine.low %v326, %v333
    %v336 = vunpack.c.l.s4 1966171168
    %v337 = vunpack.c.0.s8 %v336
    %v338 = vlaneseq
    %v339 = vshrl.u32 %v338, 7
    %v340 = vsub.s32 %v337, %v339
    %v341 = vrot.slane %v334, %v340
    %v343 = vadd.f32 %v71, %v341
    %v344 = vtanh.pop %v343
    %v345 = vmul.f32 %v344, 0.5
    %v346 = vadd.f32 %v345, 0.5
    %v348 = vrot.slane %v344, 1
    %v350 = vmul.f32 %v348, 0.5
    %v351 = vadd.f32 %v350, 0.5
    %v352 = vrot.slane %v344, 3
    %v354 = vmul.f32 %v352, 0.5
    %v355 = vadd.f32 %v354, 0.5
    %v356 = vmul.f32 %v351, 0.0
    %v357 = vrot.slane %v344, 2
    %v359 = vmul.f32 %v346, %v357
    %v360 = vadd.f32 %v356, %v359
    %v361 = vtanh.pop %v360
    %v362 = vmul.f32 %v355, %v361
    %s363 = scalar_lea.vmem [#allocation2], 1
    %v364 = vld [vmem:[%s363] ss:$8 sm:$0xf]
    %v365 = vpack.c.bf16 %v362, %v362
    %366 = vmatprep.subr.bf16.mxu0 %v169
    %367 = vmatpush1.bf16.msra.mxu0 %v168
    %368 = vmatprep.subr.bf16.mxu0 %v173
    %369 = vmatpush1.bf16.msra.mxu0 %v172
    %370 = vmatprep.subr.bf16.mxu0 %v177
    %371 = vmatpush1.bf16.msra.mxu0 %v176
    %372 = vmatprep.subr.bf16.mxu0 %v181
    %373 = vmatpush1.bf16.msra.mxu0 %v180
    %374 = vmatprep.subr.bf16.mxu0 %v185
    %375 = vmatpush1.bf16.msra.mxu0 %v184
    %376 = vmatprep.subr.bf16.mxu0 %v189
    %377 = vmatpush1.bf16.msra.mxu0 %v188
    %378 = vmatprep.subr.bf16.mxu0 %v193
    %379 = vmatpush1.bf16.msra.mxu0 %v192
    %380 = vmatprep.subr.bf16.mxu0 %v197
    %381 = vmatpush1.bf16.msra.mxu0 %v196
    %382 = vmatprep.subr.bf16.mxu0 0
    %383 = vmatpush1.bf16.msra.mxu0 0
    %384 = vmatprep.subr.bf16.mxu0 0
    %385 = vmatpush1.bf16.msra.mxu0 0
    %386 = vmatprep.subr.bf16.mxu0 0
    %387 = vmatpush1.bf16.msra.mxu0 0
    %388 = vmatprep.subr.bf16.mxu0 0
    %389 = vmatpush1.bf16.msra.mxu0 0
    %390 = vmatprep.subr.bf16.mxu0 0
    %391 = vmatpush1.bf16.msra.mxu0 0
    %392 = vmatprep.subr.bf16.mxu0 0
    %393 = vmatpush1.bf16.msra.mxu0 0
    %394 = vmatprep.subr.bf16.mxu0 0
    %395 = vmatpush1.bf16.msra.mxu0 0
    %396 = vmatprep.subr.bf16.mxu0 0
    %397 = vmatpush1.bf16.msra.mxu0 0
    %398 = vmatprep.mubr.bf16.mxu0 0
    %399 = vmatmul.mubr.bf16.gmra.mrb[0].mxu0 %v365
    %v400 = vpop.f32.mrb[0].mxu0
    %v401 = vadd.f32 0.0, %v400
    %v402 = vpop.f32.mrb[0].mxu0
    %v403 = vadd.f32 0.0, %v402
    %v404 = vpop.f32.mrb[0].mxu0
    %v405 = vpop.f32.mrb[0].mxu0
    %406 = vdwg.mxu0
    %407 = vmatprep.subr.bf16.mxu0 %v171
    %408 = vmatpush1.bf16.msra.mxu0 %v170
    %409 = vmatprep.subr.bf16.mxu0 %v175
    %410 = vmatpush1.bf16.msra.mxu0 %v174
    %411 = vmatprep.subr.bf16.mxu0 %v179
    %412 = vmatpush1.bf16.msra.mxu0 %v178
    %413 = vmatprep.subr.bf16.mxu0 %v183
    %414 = vmatpush1.bf16.msra.mxu0 %v182
    %415 = vmatprep.subr.bf16.mxu0 %v187
    %416 = vmatpush1.bf16.msra.mxu0 %v186
    %417 = vmatprep.subr.bf16.mxu0 %v191
    %418 = vmatpush1.bf16.msra.mxu0 %v190
    %419 = vmatprep.subr.bf16.mxu0 %v195
    %420 = vmatpush1.bf16.msra.mxu0 %v194
    %421 = vmatprep.subr.bf16.mxu0 %v199
    %422 = vmatpush1.bf16.msra.mxu0 %v198
    %423 = vmatprep.subr.bf16.mxu0 0
    %424 = vmatpush1.bf16.msra.mxu0 0
    %425 = vmatprep.subr.bf16.mxu0 0
    %426 = vmatpush1.bf16.msra.mxu0 0
    %427 = vmatprep.subr.bf16.mxu0 0
    %428 = vmatpush1.bf16.msra.mxu0 0
    %429 = vmatprep.subr.bf16.mxu0 0
    %430 = vmatpush1.bf16.msra.mxu0 0
    %431 = vmatprep.subr.bf16.mxu0 0
    %432 = vmatpush1.bf16.msra.mxu0 0
    %433 = vmatprep.subr.bf16.mxu0 0
    %434 = vmatpush1.bf16.msra.mxu0 0
    %435 = vmatprep.subr.bf16.mxu0 0
    %436 = vmatpush1.bf16.msra.mxu0 0
    %437 = vmatprep.subr.bf16.mxu0 0
    %438 = vmatpush1.bf16.msra.mxu0 0
    %439 = vmatprep.mubr.bf16.mxu0 0
    %440 = vmatmul.mubr.bf16.gmra.mrb[0].mxu0 %v365
    %v441 = vpop.f32.mrb[0].mxu0
    %v442 = vadd.f32 0.0, %v441
    %v443 = vpop.f32.mrb[0].mxu0
    %v444 = vadd.f32 0.0, %v443
    %v445 = vpop.f32.mrb[0].mxu0
    %v446 = vpop.f32.mrb[0].mxu0
    %447 = vdwg.mxu0
    %v452 = vcombine.low %v401, %v403
    %v453 = vcombine.low %v442, %v444
    %v455 = vunpack.c.l.s4 1966171168
    %v456 = vunpack.c.0.s8 %v455
    %v457 = vlaneseq
    %v458 = vshrl.u32 %v457, 7
    %v459 = vsub.s32 %v456, %v458
    %v460 = vrot.slane %v452, %v459
    %v462 = vunpack.c.l.s4 1966171168
    %v463 = vunpack.c.0.s8 %v462
    %v464 = vlaneseq
    %v465 = vshrl.u32 %v464, 7
    %v466 = vsub.s32 %v463, %v465
    %v467 = vrot.slane %v453, %v466
    %v468 = vcombine.low %v460, %v467
    %v470 = vunpack.c.l.s4 1966171168
    %v471 = vunpack.c.0.s8 %v470
    %v472 = vlaneseq
    %v473 = vshrl.u32 %v472, 7
    %v474 = vsub.s32 %v471, %v473
    %v475 = vrot.slane %v468, %v474
    %v477 = vadd.f32 %v364, %v475
    %v478 = vtanh.pop %v477
    %v479 = vmul.f32 %v478, 0.5
    %v480 = vadd.f32 %v479, 0.5
    %v482 = vrot.slane %v478, 1
    %v484 = vmul.f32 %v482, 0.5
    %v485 = vadd.f32 %v484, 0.5
    %v486 = vrot.slane %v478, 3
    %v488 = vmul.f32 %v486, 0.5
    %v489 = vadd.f32 %v488, 0.5
    %v490 = vmul.f32 %v485, %v360
    %v491 = vrot.slane %v478, 2
    %v493 = vmul.f32 %v480, %v491
    %v494 = vadd.f32 %v490, %v493
    %v495 = vtanh.pop %v494
    %v496 = vmul.f32 %v489, %v495
    %s497 = scalar_lea.vmem [#allocation2], 2
    %v498 = vld [vmem:[%s497] ss:$8 sm:$0xf]
    %v499 = vpack.c.bf16 %v496, %v496
    %500 = vmatprep.subr.bf16.mxu0 %v169
    %501 = vmatpush1.bf16.msra.mxu0 %v168
    %502 = vmatprep.subr.bf16.mxu0 %v173
    %503 = vmatpush1.bf16.msra.mxu0 %v172
    %504 = vmatprep.subr.bf16.mxu0 %v177
    %505 = vmatpush1.bf16.msra.mxu0 %v176
    %506 = vmatprep.subr.bf16.mxu0 %v181
    %507 = vmatpush1.bf16.msra.mxu0 %v180
    %508 = vmatprep.subr.bf16.mxu0 %v185
    %509 = vmatpush1.bf16.msra.mxu0 %v184
    %510 = vmatprep.subr.bf16.mxu0 %v189
    %511 = vmatpush1.bf16.msra.mxu0 %v188
    %512 = vmatprep.subr.bf16.mxu0 %v193
    %513 = vmatpush1.bf16.msra.mxu0 %v192
    %514 = vmatprep.subr.bf16.mxu0 %v197
    %515 = vmatpush1.bf16.msra.mxu0 %v196
    %516 = vmatprep.subr.bf16.mxu0 0
    %517 = vmatpush1.bf16.msra.mxu0 0
    %518 = vmatprep.subr.bf16.mxu0 0
    %519 = vmatpush1.bf16.msra.mxu0 0
    %520 = vmatprep.subr.bf16.mxu0 0
    %521 = vmatpush1.bf16.msra.mxu0 0
    %522 = vmatprep.subr.bf16.mxu0 0
    %523 = vmatpush1.bf16.msra.mxu0 0
    %524 = vmatprep.subr.bf16.mxu0 0
    %525 = vmatpush1.bf16.msra.mxu0 0
    %526 = vmatprep.subr.bf16.mxu0 0
    %527 = vmatpush1.bf16.msra.mxu0 0
    %528 = vmatprep.subr.bf16.mxu0 0
    %529 = vmatpush1.bf16.msra.mxu0 0
    %530 = vmatprep.subr.bf16.mxu0 0
    %531 = vmatpush1.bf16.msra.mxu0 0
    %532 = vmatprep.mubr.bf16.mxu0 0
    %533 = vmatmul.mubr.bf16.gmra.mrb[0].mxu0 %v499
    %v534 = vpop.f32.mrb[0].mxu0
    %v535 = vadd.f32 0.0, %v534
    %v536 = vpop.f32.mrb[0].mxu0
    %v537 = vadd.f32 0.0, %v536
    %v538 = vpop.f32.mrb[0].mxu0
    %v539 = vpop.f32.mrb[0].mxu0
    %540 = vdwg.mxu0
    %541 = vmatprep.subr.bf16.mxu0 %v171
    %542 = vmatpush1.bf16.msra.mxu0 %v170
    %543 = vmatprep.subr.bf16.mxu0 %v175
    %544 = vmatpush1.bf16.msra.mxu0 %v174
    %545 = vmatprep.subr.bf16.mxu0 %v179
    %546 = vmatpush1.bf16.msra.mxu0 %v178
    %547 = vmatprep.subr.bf16.mxu0 %v183
    %548 = vmatpush1.bf16.msra.mxu0 %v182
    %549 = vmatprep.subr.bf16.mxu0 %v187
    %550 = vmatpush1.bf16.msra.mxu0 %v186
    %551 = vmatprep.subr.bf16.mxu0 %v191
    %552 = vmatpush1.bf16.msra.mxu0 %v190
    %553 = vmatprep.subr.bf16.mxu0 %v195
    %554 = vmatpush1.bf16.msra.mxu0 %v194
    %555 = vmatprep.subr.bf16.mxu0 %v199
    %556 = vmatpush1.bf16.msra.mxu0 %v198
    %557 = vmatprep.subr.bf16.mxu0 0
    %558 = vmatpush1.bf16.msra.mxu0 0
    %559 = vmatprep.subr.bf16.mxu0 0
    %560 = vmatpush1.bf16.msra.mxu0 0
    %561 = vmatprep.subr.bf16.mxu0 0
    %562 = vmatpush1.bf16.msra.mxu0 0
    %563 = vmatprep.subr.bf16.mxu0 0
    %564 = vmatpush1.bf16.msra.mxu0 0
    %565 = vmatprep.subr.bf16.mxu0 0
    %566 = vmatpush1.bf16.msra.mxu0 0
    %567 = vmatprep.subr.bf16.mxu0 0
    %568 = vmatpush1.bf16.msra.mxu0 0
    %569 = vmatprep.subr.bf16.mxu0 0
    %570 = vmatpush1.bf16.msra.mxu0 0
    %571 = vmatprep.subr.bf16.mxu0 0
    %572 = vmatpush1.bf16.msra.mxu0 0
    %573 = vmatprep.mubr.bf16.mxu0 0
    %574 = vmatmul.mubr.bf16.gmra.mrb[0].mxu0 %v499
    %v575 = vpop.f32.mrb[0].mxu0
    %v576 = vadd.f32 0.0, %v575
    %v577 = vpop.f32.mrb[0].mxu0
    %v578 = vadd.f32 0.0, %v577
    %v579 = vpop.f32.mrb[0].mxu0
    %v580 = vpop.f32.mrb[0].mxu0
    %581 = vdwg.mxu0
    %v586 = vcombine.low %v535, %v537
    %v587 = vcombine.low %v576, %v578
    %v589 = vunpack.c.l.s4 1966171168
    %v590 = vunpack.c.0.s8 %v589
    %v591 = vlaneseq
    %v592 = vshrl.u32 %v591, 7
    %v593 = vsub.s32 %v590, %v592
    %v594 = vrot.slane %v586, %v593
    %v596 = vunpack.c.l.s4 1966171168
    %v597 = vunpack.c.0.s8 %v596
    %v598 = vlaneseq
    %v599 = vshrl.u32 %v598, 7
    %v600 = vsub.s32 %v597, %v599
    %v601 = vrot.slane %v587, %v600
    %v602 = vcombine.low %v594, %v601
    %v604 = vunpack.c.l.s4 1966171168
    %v605 = vunpack.c.0.s8 %v604
    %v606 = vlaneseq
    %v607 = vshrl.u32 %v606, 7
    %v608 = vsub.s32 %v605, %v607
    %v609 = vrot.slane %v602, %v608
    %v611 = vadd.f32 %v498, %v609
    %v612 = vtanh.pop %v611
    %v613 = vmul.f32 %v612, 0.5
    %v614 = vadd.f32 %v613, 0.5
    %v616 = vrot.slane %v612, 1
    %v618 = vmul.f32 %v616, 0.5
    %v619 = vadd.f32 %v618, 0.5
    %v620 = vrot.slane %v612, 3
    %v622 = vmul.f32 %v620, 0.5
    %v623 = vadd.f32 %v622, 0.5
    %v624 = vmul.f32 %v619, %v494
    %v625 = vrot.slane %v612, 2
    %v627 = vmul.f32 %v614, %v625
    %v628 = vadd.f32 %v624, %v627
    %v629 = vtanh.pop %v628
    %v630 = vmul.f32 %v623, %v629
    %s631 = scalar_lea.vmem [#allocation2], 3
    %v632 = vld [vmem:[%s631] ss:$8 sm:$0xf]
    %v633 = vpack.c.bf16 %v630, %v630
    %634 = vmatprep.subr.bf16.mxu0 %v169
    %635 = vmatpush1.bf16.msra.mxu0 %v168
    %636 = vmatprep.subr.bf16.mxu0 %v173
    %637 = vmatpush1.bf16.msra.mxu0 %v172
    %638 = vmatprep.subr.bf16.mxu0 %v177
    %639 = vmatpush1.bf16.msra.mxu0 %v176
    %640 = vmatprep.subr.bf16.mxu0 %v181
    %641 = vmatpush1.bf16.msra.mxu0 %v180
    %642 = vmatprep.subr.bf16.mxu0 %v185
    %643 = vmatpush1.bf16.msra.mxu0 %v184
    %644 = vmatprep.subr.bf16.mxu0 %v189
    %645 = vmatpush1.bf16.msra.mxu0 %v188
    %646 = vmatprep.subr.bf16.mxu0 %v193
    %647 = vmatpush1.bf16.msra.mxu0 %v192
    %648 = vmatprep.subr.bf16.mxu0 %v197
    %649 = vmatpush1.bf16.msra.mxu0 %v196
    %650 = vmatprep.subr.bf16.mxu0 0
    %651 = vmatpush1.bf16.msra.mxu0 0
    %652 = vmatprep.subr.bf16.mxu0 0
    %653 = vmatpush1.bf16.msra.mxu0 0
    %654 = vmatprep.subr.bf16.mxu0 0
    %655 = vmatpush1.bf16.msra.mxu0 0
    %656 = vmatprep.subr.bf16.mxu0 0
    %657 = vmatpush1.bf16.msra.mxu0 0
    %658 = vmatprep.subr.bf16.mxu0 0
    %659 = vmatpush1.bf16.msra.mxu0 0
    %660 = vmatprep.subr.bf16.mxu0 0
    %661 = vmatpush1.bf16.msra.mxu0 0
    %662 = vmatprep.subr.bf16.mxu0 0
    %663 = vmatpush1.bf16.msra.mxu0 0
    %664 = vmatprep.subr.bf16.mxu0 0
    %665 = vmatpush1.bf16.msra.mxu0 0
    %666 = vmatprep.mubr.bf16.mxu0 0
    %667 = vmatmul.mubr.bf16.gmra.mrb[0].mxu0 %v633
    %v668 = vpop.f32.mrb[0].mxu0
    %v669 = vadd.f32 0.0, %v668
    %v670 = vpop.f32.mrb[0].mxu0
    %v671 = vadd.f32 0.0, %v670
    %v672 = vpop.f32.mrb[0].mxu0
    %v673 = vpop.f32.mrb[0].mxu0
    %674 = vdwg.mxu0
    %675 = vmatprep.subr.bf16.mxu0 %v171
    %676 = vmatpush1.bf16.msra.mxu0 %v170
    %677 = vmatprep.subr.bf16.mxu0 %v175
    %678 = vmatpush1.bf16.msra.mxu0 %v174
    %679 = vmatprep.subr.bf16.mxu0 %v179
    %680 = vmatpush1.bf16.msra.mxu0 %v178
    %681 = vmatprep.subr.bf16.mxu0 %v183
    %682 = vmatpush1.bf16.msra.mxu0 %v182
    %683 = vmatprep.subr.bf16.mxu0 %v187
    %684 = vmatpush1.bf16.msra.mxu0 %v186
    %685 = vmatprep.subr.bf16.mxu0 %v191
    %686 = vmatpush1.bf16.msra.mxu0 %v190
    %687 = vmatprep.subr.bf16.mxu0 %v195
    %688 = vmatpush1.bf16.msra.mxu0 %v194
    %689 = vmatprep.subr.bf16.mxu0 %v199
    %690 = vmatpush1.bf16.msra.mxu0 %v198
    %691 = vmatprep.subr.bf16.mxu0 0
    %692 = vmatpush1.bf16.msra.mxu0 0
    %693 = vmatprep.subr.bf16.mxu0 0
    %694 = vmatpush1.bf16.msra.mxu0 0
    %695 = vmatprep.subr.bf16.mxu0 0
    %696 = vmatpush1.bf16.msra.mxu0 0
    %697 = vmatprep.subr.bf16.mxu0 0
    %698 = vmatpush1.bf16.msra.mxu0 0
    %699 = vmatprep.subr.bf16.mxu0 0
    %700 = vmatpush1.bf16.msra.mxu0 0
    %701 = vmatprep.subr.bf16.mxu0 0
    %702 = vmatpush1.bf16.msra.mxu0 0
    %703 = vmatprep.subr.bf16.mxu0 0
    %704 = vmatpush1.bf16.msra.mxu0 0
    %705 = vmatprep.subr.bf16.mxu0 0
    %706 = vmatpush1.bf16.msra.mxu0 0
    %707 = vmatprep.mubr.bf16.mxu0 0
    %708 = vmatmul.mubr.bf16.gmra.mrb[0].mxu0 %v633
    %v709 = vpop.f32.mrb[0].mxu0
    %v710 = vadd.f32 0.0, %v709
    %v711 = vpop.f32.mrb[0].mxu0
    %v712 = vadd.f32 0.0, %v711
    %v713 = vpop.f32.mrb[0].mxu0
    %v714 = vpop.f32.mrb[0].mxu0
    %715 = vdwg.mxu0
    %v720 = vcombine.low %v669, %v671
    %v721 = vcombine.low %v710, %v712
    %v723 = vunpack.c.l.s4 1966171168
    %v724 = vunpack.c.0.s8 %v723
    %v725 = vlaneseq
    %v726 = vshrl.u32 %v725, 7
    %v727 = vsub.s32 %v724, %v726
    %v728 = vrot.slane %v720, %v727
    %v730 = vunpack.c.l.s4 1966171168
    %v731 = vunpack.c.0.s8 %v730
    %v732 = vlaneseq
    %v733 = vshrl.u32 %v732, 7
    %v734 = vsub.s32 %v731, %v733
    %v735 = vrot.slane %v721, %v734
    %v736 = vcombine.low %v728, %v735
    %v738 = vunpack.c.l.s4 1966171168
    %v739 = vunpack.c.0.s8 %v738
    %v740 = vlaneseq
    %v741 = vshrl.u32 %v740, 7
    %v742 = vsub.s32 %v739, %v741
    %v743 = vrot.slane %v736, %v742
    %v745 = vadd.f32 %v632, %v743
    %v746 = vtanh.pop %v745
    %v747 = vmul.f32 %v746, 0.5
    %v748 = vadd.f32 %v747, 0.5
    %v750 = vrot.slane %v746, 1
    %v752 = vmul.f32 %v750, 0.5
    %v753 = vadd.f32 %v752, 0.5
    %v754 = vrot.slane %v746, 3
    %v756 = vmul.f32 %v754, 0.5
    %v757 = vadd.f32 %v756, 0.5
    %v758 = vmul.f32 %v753, %v628
    %v759 = vrot.slane %v746, 2
    %v761 = vmul.f32 %v748, %v759
    %v762 = vadd.f32 %v758, %v761
    %v763 = vtanh.pop %v762
    %v764 = vmul.f32 %v757, %v763
    %s765 = scalar_lea.vmem [#allocation2], 4
    %v766 = vld [vmem:[%s765] ss:$8 sm:$0xf]
    %v767 = vpack.c.bf16 %v764, %v764
    %768 = vmatprep.subr.bf16.mxu0 %v169
    %769 = vmatpush1.bf16.msra.mxu0 %v168
    %770 = vmatprep.subr.bf16.mxu0 %v173
    %771 = vmatpush1.bf16.msra.mxu0 %v172
    %772 = vmatprep.subr.bf16.mxu0 %v177
    %773 = vmatpush1.bf16.msra.mxu0 %v176
    %774 = vmatprep.subr.bf16.mxu0 %v181
    %775 = vmatpush1.bf16.msra.mxu0 %v180
    %776 = vmatprep.subr.bf16.mxu0 %v185
    %777 = vmatpush1.bf16.msra.mxu0 %v184
    %778 = vmatprep.subr.bf16.mxu0 %v189
    %779 = vmatpush1.bf16.msra.mxu0 %v188
    %780 = vmatprep.subr.bf16.mxu0 %v193
    %781 = vmatpush1.bf16.msra.mxu0 %v192
    %782 = vmatprep.subr.bf16.mxu0 %v197
    %783 = vmatpush1.bf16.msra.mxu0 %v196
    %784 = vmatprep.subr.bf16.mxu0 0
    %785 = vmatpush1.bf16.msra.mxu0 0
    %786 = vmatprep.subr.bf16.mxu0 0
    %787 = vmatpush1.bf16.msra.mxu0 0
    %788 = vmatprep.subr.bf16.mxu0 0
    %789 = vmatpush1.bf16.msra.mxu0 0
    %790 = vmatprep.subr.bf16.mxu0 0
    %791 = vmatpush1.bf16.msra.mxu0 0
    %792 = vmatprep.subr.bf16.mxu0 0
    %793 = vmatpush1.bf16.msra.mxu0 0
    %794 = vmatprep.subr.bf16.mxu0 0
    %795 = vmatpush1.bf16.msra.mxu0 0
    %796 = vmatprep.subr.bf16.mxu0 0
    %797 = vmatpush1.bf16.msra.mxu0 0
    %798 = vmatprep.subr.bf16.mxu0 0
    %799 = vmatpush1.bf16.msra.mxu0 0
    %800 = vmatprep.mubr.bf16.mxu0 0
    %801 = vmatmul.mubr.bf16.gmra.mrb[0].mxu0 %v767
    %v802 = vpop.f32.mrb[0].mxu0
    %v803 = vadd.f32 0.0, %v802
    %v804 = vpop.f32.mrb[0].mxu0
    %v805 = vadd.f32 0.0, %v804
    %v806 = vpop.f32.mrb[0].mxu0
    %v807 = vpop.f32.mrb[0].mxu0
    %808 = vdwg.mxu0
    %809 = vmatprep.subr.bf16.mxu0 %v171
    %810 = vmatpush1.bf16.msra.mxu0 %v170
    %811 = vmatprep.subr.bf16.mxu0 %v175
    %812 = vmatpush1.bf16.msra.mxu0 %v174
    %813 = vmatprep.subr.bf16.mxu0 %v179
    %814 = vmatpush1.bf16.msra.mxu0 %v178
    %815 = vmatprep.subr.bf16.mxu0 %v183
    %816 = vmatpush1.bf16.msra.mxu0 %v182
    %817 = vmatprep.subr.bf16.mxu0 %v187
    %818 = vmatpush1.bf16.msra.mxu0 %v186
    %819 = vmatprep.subr.bf16.mxu0 %v191
    %820 = vmatpush1.bf16.msra.mxu0 %v190
    %821 = vmatprep.subr.bf16.mxu0 %v195
    %822 = vmatpush1.bf16.msra.mxu0 %v194
    %823 = vmatprep.subr.bf16.mxu0 %v199
    %824 = vmatpush1.bf16.msra.mxu0 %v198
    %825 = vmatprep.subr.bf16.mxu0 0
    %826 = vmatpush1.bf16.msra.mxu0 0
    %827 = vmatprep.subr.bf16.mxu0 0
    %828 = vmatpush1.bf16.msra.mxu0 0
    %829 = vmatprep.subr.bf16.mxu0 0
    %830 = vmatpush1.bf16.msra.mxu0 0
    %831 = vmatprep.subr.bf16.mxu0 0
    %832 = vmatpush1.bf16.msra.mxu0 0
    %833 = vmatprep.subr.bf16.mxu0 0
    %834 = vmatpush1.bf16.msra.mxu0 0
    %835 = vmatprep.subr.bf16.mxu0 0
    %836 = vmatpush1.bf16.msra.mxu0 0
    %837 = vmatprep.subr.bf16.mxu0 0
    %838 = vmatpush1.bf16.msra.mxu0 0
    %839 = vmatprep.subr.bf16.mxu0 0
    %840 = vmatpush1.bf16.msra.mxu0 0
    %841 = vmatprep.mubr.bf16.mxu0 0
    %842 = vmatmul.mubr.bf16.gmra.mrb[0].mxu0 %v767
    %v843 = vpop.f32.mrb[0].mxu0
    %v844 = vadd.f32 0.0, %v843
    %v845 = vpop.f32.mrb[0].mxu0
    %v846 = vadd.f32 0.0, %v845
    %v847 = vpop.f32.mrb[0].mxu0
    %v848 = vpop.f32.mrb[0].mxu0
    %849 = vdwg.mxu0
    %v854 = vcombine.low %v803, %v805
    %v855 = vcombine.low %v844, %v846
    %v857 = vunpack.c.l.s4 1966171168
    %v858 = vunpack.c.0.s8 %v857
    %v859 = vlaneseq
    %v860 = vshrl.u32 %v859, 7
    %v861 = vsub.s32 %v858, %v860
    %v862 = vrot.slane %v854, %v861
    %v864 = vunpack.c.l.s4 1966171168
    %v865 = vunpack.c.0.s8 %v864
    %v866 = vlaneseq
    %v867 = vshrl.u32 %v866, 7
    %v868 = vsub.s32 %v865, %v867
    %v869 = vrot.slane %v855, %v868
    %v870 = vcombine.low %v862, %v869
    %v872 = vunpack.c.l.s4 1966171168
    %v873 = vunpack.c.0.s8 %v872
    %v874 = vlaneseq
    %v875 = vshrl.u32 %v874, 7
    %v876 = vsub.s32 %v873, %v875
    %v877 = vrot.slane %v870, %v876
    %v879 = vadd.f32 %v766, %v877
    %v880 = vtanh.pop %v879
    %v881 = vmul.f32 %v880, 0.5
    %v882 = vadd.f32 %v881, 0.5
    %v884 = vrot.slane %v880, 1
    %v886 = vmul.f32 %v884, 0.5
    %v887 = vadd.f32 %v886, 0.5
    %v888 = vrot.slane %v880, 3
    %v890 = vmul.f32 %v888, 0.5
    %v891 = vadd.f32 %v890, 0.5
    %v892 = vmul.f32 %v887, %v762
    %v893 = vrot.slane %v880, 2
    %v895 = vmul.f32 %v882, %v893
    %v896 = vadd.f32 %v892, %v895
    %v897 = vtanh.pop %v896
    %v898 = vmul.f32 %v891, %v897
    %s899 = scalar_lea.vmem [#allocation2], 5
    %v900 = vld [vmem:[%s899] ss:$8 sm:$0xf]
    %v901 = vpack.c.bf16 %v898, %v898
    %902 = vmatprep.subr.bf16.mxu0 %v169
    %903 = vmatpush1.bf16.msra.mxu0 %v168
    %904 = vmatprep.subr.bf16.mxu0 %v173
    %905 = vmatpush1.bf16.msra.mxu0 %v172
    %906 = vmatprep.subr.bf16.mxu0 %v177
    %907 = vmatpush1.bf16.msra.mxu0 %v176
    %908 = vmatprep.subr.bf16.mxu0 %v181
    %909 = vmatpush1.bf16.msra.mxu0 %v180
    %910 = vmatprep.subr.bf16.mxu0 %v185
    %911 = vmatpush1.bf16.msra.mxu0 %v184
    %912 = vmatprep.subr.bf16.mxu0 %v189
    %913 = vmatpush1.bf16.msra.mxu0 %v188
    %914 = vmatprep.subr.bf16.mxu0 %v193
    %915 = vmatpush1.bf16.msra.mxu0 %v192
    %916 = vmatprep.subr.bf16.mxu0 %v197
    %917 = vmatpush1.bf16.msra.mxu0 %v196
    %918 = vmatprep.subr.bf16.mxu0 0
    %919 = vmatpush1.bf16.msra.mxu0 0
    %920 = vmatprep.subr.bf16.mxu0 0
    %921 = vmatpush1.bf16.msra.mxu0 0
    %922 = vmatprep.subr.bf16.mxu0 0
    %923 = vmatpush1.bf16.msra.mxu0 0
    %924 = vmatprep.subr.bf16.mxu0 0
    %925 = vmatpush1.bf16.msra.mxu0 0
    %926 = vmatprep.subr.bf16.mxu0 0
    %927 = vmatpush1.bf16.msra.mxu0 0
    %928 = vmatprep.subr.bf16.mxu0 0
    %929 = vmatpush1.bf16.msra.mxu0 0
    %930 = vmatprep.subr.bf16.mxu0 0
    %931 = vmatpush1.bf16.msra.mxu0 0
    %932 = vmatprep.subr.bf16.mxu0 0
    %933 = vmatpush1.bf16.msra.mxu0 0
    %934 = vmatprep.mubr.bf16.mxu0 0
    %935 = vmatmul.mubr.bf16.gmra.mrb[0].mxu0 %v901
    %v936 = vpop.f32.mrb[0].mxu0
    %v937 = vadd.f32 0.0, %v936
    %v938 = vpop.f32.mrb[0].mxu0
    %v939 = vadd.f32 0.0, %v938
    %v940 = vpop.f32.mrb[0].mxu0
    %v941 = vpop.f32.mrb[0].mxu0
    %942 = vdwg.mxu0
    %943 = vmatprep.subr.bf16.mxu0 %v171
    %944 = vmatpush1.bf16.msra.mxu0 %v170
    %945 = vmatprep.subr.bf16.mxu0 %v175
    %946 = vmatpush1.bf16.msra.mxu0 %v174
    %947 = vmatprep.subr.bf16.mxu0 %v179
    %948 = vmatpush1.bf16.msra.mxu0 %v178
    %949 = vmatprep.subr.bf16.mxu0 %v183
    %950 = vmatpush1.bf16.msra.mxu0 %v182
    %951 = vmatprep.subr.bf16.mxu0 %v187
    %952 = vmatpush1.bf16.msra.mxu0 %v186
    %953 = vmatprep.subr.bf16.mxu0 %v191
    %954 = vmatpush1.bf16.msra.mxu0 %v190
    %955 = vmatprep.subr.bf16.mxu0 %v195
    %956 = vmatpush1.bf16.msra.mxu0 %v194
    %957 = vmatprep.subr.bf16.mxu0 %v199
    %958 = vmatpush1.bf16.msra.mxu0 %v198
    %959 = vmatprep.subr.bf16.mxu0 0
    %960 = vmatpush1.bf16.msra.mxu0 0
    %961 = vmatprep.subr.bf16.mxu0 0
    %962 = vmatpush1.bf16.msra.mxu0 0
    %963 = vmatprep.subr.bf16.mxu0 0
    %964 = vmatpush1.bf16.msra.mxu0 0
    %965 = vmatprep.subr.bf16.mxu0 0
    %966 = vmatpush1.bf16.msra.mxu0 0
    %967 = vmatprep.subr.bf16.mxu0 0
    %968 = vmatpush1.bf16.msra.mxu0 0
    %969 = vmatprep.subr.bf16.mxu0 0
    %970 = vmatpush1.bf16.msra.mxu0 0
    %971 = vmatprep.subr.bf16.mxu0 0
    %972 = vmatpush1.bf16.msra.mxu0 0
    %973 = vmatprep.subr.bf16.mxu0 0
    %974 = vmatpush1.bf16.msra.mxu0 0
    %975 = vmatprep.mubr.bf16.mxu0 0
    %976 = vmatmul.mubr.bf16.gmra.mrb[0].mxu0 %v901
    %v977 = vpop.f32.mrb[0].mxu0
    %v978 = vadd.f32 0.0, %v977
    %v979 = vpop.f32.mrb[0].mxu0
    %v980 = vadd.f32 0.0, %v979
    %v981 = vpop.f32.mrb[0].mxu0
    %v982 = vpop.f32.mrb[0].mxu0
    %983 = vdwg.mxu0
    %v988 = vcombine.low %v937, %v939
    %v989 = vcombine.low %v978, %v980
    %v991 = vunpack.c.l.s4 1966171168
    %v992 = vunpack.c.0.s8 %v991
    %v993 = vlaneseq
    %v994 = vshrl.u32 %v993, 7
    %v995 = vsub.s32 %v992, %v994
    %v996 = vrot.slane %v988, %v995
    %v998 = vunpack.c.l.s4 1966171168
    %v999 = vunpack.c.0.s8 %v998
    %v1000 = vlaneseq
    %v1001 = vshrl.u32 %v1000, 7
    %v1002 = vsub.s32 %v999, %v1001
    %v1003 = vrot.slane %v989, %v1002
    %v1004 = vcombine.low %v996, %v1003
    %v1006 = vunpack.c.l.s4 1966171168
    %v1007 = vunpack.c.0.s8 %v1006
    %v1008 = vlaneseq
    %v1009 = vshrl.u32 %v1008, 7
    %v1010 = vsub.s32 %v1007, %v1009
    %v1011 = vrot.slane %v1004, %v1010
    %v1013 = vadd.f32 %v900, %v1011
    %v1014 = vtanh.pop %v1013
    %v1015 = vmul.f32 %v1014, 0.5
    %v1016 = vadd.f32 %v1015, 0.5
    %v1018 = vrot.slane %v1014, 1
    %v1020 = vmul.f32 %v1018, 0.5
    %v1021 = vadd.f32 %v1020, 0.5
    %v1022 = vrot.slane %v1014, 3
    %v1024 = vmul.f32 %v1022, 0.5
    %v1025 = vadd.f32 %v1024, 0.5
    %v1026 = vmul.f32 %v1021, %v896
    %v1027 = vrot.slane %v1014, 2
    %v1029 = vmul.f32 %v1016, %v1027
    %v1030 = vadd.f32 %v1026, %v1029
    %v1031 = vtanh.pop %v1030
    %v1032 = vmul.f32 %v1025, %v1031
    %s1033 = scalar_lea.vmem [#allocation2], 6
    %v1034 = vld [vmem:[%s1033] ss:$8 sm:$0xf]
    %v1035 = vpack.c.bf16 %v1032, %v1032
    %1036 = vmatprep.subr.bf16.mxu0 %v169
    %1037 = vmatpush1.bf16.msra.mxu0 %v168
    %1038 = vmatprep.subr.bf16.mxu0 %v173
    %1039 = vmatpush1.bf16.msra.mxu0 %v172
    %1040 = vmatprep.subr.bf16.mxu0 %v177
    %1041 = vmatpush1.bf16.msra.mxu0 %v176
    %1042 = vmatprep.subr.bf16.mxu0 %v181
    %1043 = vmatpush1.bf16.msra.mxu0 %v180
    %1044 = vmatprep.subr.bf16.mxu0 %v185
    %1045 = vmatpush1.bf16.msra.mxu0 %v184
    %1046 = vmatprep.subr.bf16.mxu0 %v189
    %1047 = vmatpush1.bf16.msra.mxu0 %v188
    %1048 = vmatprep.subr.bf16.mxu0 %v193
    %1049 = vmatpush1.bf16.msra.mxu0 %v192
    %1050 = vmatprep.subr.bf16.mxu0 %v197
    %1051 = vmatpush1.bf16.msra.mxu0 %v196
    %1052 = vmatprep.subr.bf16.mxu0 0
    %1053 = vmatpush1.bf16.msra.mxu0 0
    %1054 = vmatprep.subr.bf16.mxu0 0
    %1055 = vmatpush1.bf16.msra.mxu0 0
    %1056 = vmatprep.subr.bf16.mxu0 0
    %1057 = vmatpush1.bf16.msra.mxu0 0
    %1058 = vmatprep.subr.bf16.mxu0 0
    %1059 = vmatpush1.bf16.msra.mxu0 0
    %1060 = vmatprep.subr.bf16.mxu0 0
    %1061 = vmatpush1.bf16.msra.mxu0 0
    %1062 = vmatprep.subr.bf16.mxu0 0
    %1063 = vmatpush1.bf16.msra.mxu0 0
    %1064 = vmatprep.subr.bf16.mxu0 0
    %1065 = vmatpush1.bf16.msra.mxu0 0
    %1066 = vmatprep.subr.bf16.mxu0 0
    %1067 = vmatpush1.bf16.msra.mxu0 0
    %1068 = vmatprep.mubr.bf16.mxu0 0
    %1069 = vmatmul.mubr.bf16.gmra.mrb[0].mxu0 %v1035
    %v1070 = vpop.f32.mrb[0].mxu0
    %v1071 = vadd.f32 0.0, %v1070
    %v1072 = vpop.f32.mrb[0].mxu0
    %v1073 = vadd.f32 0.0, %v1072
    %v1074 = vpop.f32.mrb[0].mxu0
    %v1075 = vpop.f32.mrb[0].mxu0
    %1076 = vdwg.mxu0
    %1077 = vmatprep.subr.bf16.mxu0 %v171
    %1078 = vmatpush1.bf16.msra.mxu0 %v170
    %1079 = vmatprep.subr.bf16.mxu0 %v175
    %1080 = vmatpush1.bf16.msra.mxu0 %v174
    %1081 = vmatprep.subr.bf16.mxu0 %v179
    %1082 = vmatpush1.bf16.msra.mxu0 %v178
    %1083 = vmatprep.subr.bf16.mxu0 %v183
    %1084 = vmatpush1.bf16.msra.mxu0 %v182
    %1085 = vmatprep.subr.bf16.mxu0 %v187
    %1086 = vmatpush1.bf16.msra.mxu0 %v186
    %1087 = vmatprep.subr.bf16.mxu0 %v191
    %1088 = vmatpush1.bf16.msra.mxu0 %v190
    %1089 = vmatprep.subr.bf16.mxu0 %v195
    %1090 = vmatpush1.bf16.msra.mxu0 %v194
    %1091 = vmatprep.subr.bf16.mxu0 %v199
    %1092 = vmatpush1.bf16.msra.mxu0 %v198
    %1093 = vmatprep.subr.bf16.mxu0 0
    %1094 = vmatpush1.bf16.msra.mxu0 0
    %1095 = vmatprep.subr.bf16.mxu0 0
    %1096 = vmatpush1.bf16.msra.mxu0 0
    %1097 = vmatprep.subr.bf16.mxu0 0
    %1098 = vmatpush1.bf16.msra.mxu0 0
    %1099 = vmatprep.subr.bf16.mxu0 0
    %1100 = vmatpush1.bf16.msra.mxu0 0
    %1101 = vmatprep.subr.bf16.mxu0 0
    %1102 = vmatpush1.bf16.msra.mxu0 0
    %1103 = vmatprep.subr.bf16.mxu0 0
    %1104 = vmatpush1.bf16.msra.mxu0 0
    %1105 = vmatprep.subr.bf16.mxu0 0
    %1106 = vmatpush1.bf16.msra.mxu0 0
    %1107 = vmatprep.subr.bf16.mxu0 0
    %1108 = vmatpush1.bf16.msra.mxu0 0
    %1109 = vmatprep.mubr.bf16.mxu0 0
    %1110 = vmatmul.mubr.bf16.gmra.mrb[0].mxu0 %v1035
    %v1111 = vpop.f32.mrb[0].mxu0
    %v1112 = vadd.f32 0.0, %v1111
    %v1113 = vpop.f32.mrb[0].mxu0
    %v1114 = vadd.f32 0.0, %v1113
    %v1115 = vpop.f32.mrb[0].mxu0
    %v1116 = vpop.f32.mrb[0].mxu0
    %1117 = vdwg.mxu0
    %v1122 = vcombine.low %v1071, %v1073
    %v1123 = vcombine.low %v1112, %v1114
    %v1125 = vunpack.c.l.s4 1966171168
    %v1126 = vunpack.c.0.s8 %v1125
    %v1127 = vlaneseq
    %v1128 = vshrl.u32 %v1127, 7
    %v1129 = vsub.s32 %v1126, %v1128
    %v1130 = vrot.slane %v1122, %v1129
    %v1132 = vunpack.c.l.s4 1966171168
    %v1133 = vunpack.c.0.s8 %v1132
    %v1134 = vlaneseq
    %v1135 = vshrl.u32 %v1134, 7
    %v1136 = vsub.s32 %v1133, %v1135
    %v1137 = vrot.slane %v1123, %v1136
    %v1138 = vcombine.low %v1130, %v1137
    %v1140 = vunpack.c.l.s4 1966171168
    %v1141 = vunpack.c.0.s8 %v1140
    %v1142 = vlaneseq
    %v1143 = vshrl.u32 %v1142, 7
    %v1144 = vsub.s32 %v1141, %v1143
    %v1145 = vrot.slane %v1138, %v1144
    %v1147 = vadd.f32 %v1034, %v1145
    %v1148 = vtanh.pop %v1147
    %v1149 = vmul.f32 %v1148, 0.5
    %v1150 = vadd.f32 %v1149, 0.5
    %v1152 = vrot.slane %v1148, 1
    %v1154 = vmul.f32 %v1152, 0.5
    %v1155 = vadd.f32 %v1154, 0.5
    %v1156 = vrot.slane %v1148, 3
    %v1158 = vmul.f32 %v1156, 0.5
    %v1159 = vadd.f32 %v1158, 0.5
    %v1160 = vmul.f32 %v1155, %v1030
    %v1161 = vrot.slane %v1148, 2
    %v1163 = vmul.f32 %v1150, %v1161
    %v1164 = vadd.f32 %v1160, %v1163
    %v1165 = vtanh.pop %v1164
    %v1166 = vmul.f32 %v1159, %v1165
    %s1167 = scalar_lea.vmem [#allocation2], 7
    %v1168 = vld [vmem:[%s1167] ss:$8 sm:$0xf]
    %v1169 = vpack.c.bf16 %v1166, %v1166
    %1170 = vmatprep.subr.bf16.mxu0 %v169
    %1171 = vmatpush1.bf16.msra.mxu0 %v168
    %1172 = vmatprep.subr.bf16.mxu0 %v173
    %1173 = vmatpush1.bf16.msra.mxu0 %v172
    %1174 = vmatprep.subr.bf16.mxu0 %v177
    %1175 = vmatpush1.bf16.msra.mxu0 %v176
    %1176 = vmatprep.subr.bf16.mxu0 %v181
    %1177 = vmatpush1.bf16.msra.mxu0 %v180
    %1178 = vmatprep.subr.bf16.mxu0 %v185
    %1179 = vmatpush1.bf16.msra.mxu0 %v184
    %1180 = vmatprep.subr.bf16.mxu0 %v189
    %1181 = vmatpush1.bf16.msra.mxu0 %v188
    %1182 = vmatprep.subr.bf16.mxu0 %v193
    %1183 = vmatpush1.bf16.msra.mxu0 %v192
    %1184 = vmatprep.subr.bf16.mxu0 %v197
    %1185 = vmatpush1.bf16.msra.mxu0 %v196
    %1186 = vmatprep.subr.bf16.mxu0 0
    %1187 = vmatpush1.bf16.msra.mxu0 0
    %1188 = vmatprep.subr.bf16.mxu0 0
    %1189 = vmatpush1.bf16.msra.mxu0 0
    %1190 = vmatprep.subr.bf16.mxu0 0
    %1191 = vmatpush1.bf16.msra.mxu0 0
    %1192 = vmatprep.subr.bf16.mxu0 0
    %1193 = vmatpush1.bf16.msra.mxu0 0
    %1194 = vmatprep.subr.bf16.mxu0 0
    %1195 = vmatpush1.bf16.msra.mxu0 0
    %1196 = vmatprep.subr.bf16.mxu0 0
    %1197 = vmatpush1.bf16.msra.mxu0 0
    %1198 = vmatprep.subr.bf16.mxu0 0
    %1199 = vmatpush1.bf16.msra.mxu0 0
    %1200 = vmatprep.subr.bf16.mxu0 0
    %1201 = vmatpush1.bf16.msra.mxu0 0
    %1202 = vmatprep.mubr.bf16.mxu0 0
    %1203 = vmatmul.mubr.bf16.gmra.mrb[0].mxu0 %v1169
    %v1204 = vpop.f32.mrb[0].mxu0
    %v1205 = vadd.f32 0.0, %v1204
    %v1206 = vpop.f32.mrb[0].mxu0
    %v1207 = vadd.f32 0.0, %v1206
    %v1208 = vpop.f32.mrb[0].mxu0
    %v1209 = vpop.f32.mrb[0].mxu0
    %1210 = vdwg.mxu0
    %1211 = vmatprep.subr.bf16.mxu0 %v171
    %1212 = vmatpush1.bf16.msra.mxu0 %v170
    %1213 = vmatprep.subr.bf16.mxu0 %v175
    %1214 = vmatpush1.bf16.msra.mxu0 %v174
    %1215 = vmatprep.subr.bf16.mxu0 %v179
    %1216 = vmatpush1.bf16.msra.mxu0 %v178
    %1217 = vmatprep.subr.bf16.mxu0 %v183
    %1218 = vmatpush1.bf16.msra.mxu0 %v182
    %1219 = vmatprep.subr.bf16.mxu0 %v187
    %1220 = vmatpush1.bf16.msra.mxu0 %v186
    %1221 = vmatprep.subr.bf16.mxu0 %v191
    %1222 = vmatpush1.bf16.msra.mxu0 %v190
    %1223 = vmatprep.subr.bf16.mxu0 %v195
    %1224 = vmatpush1.bf16.msra.mxu0 %v194
    %1225 = vmatprep.subr.bf16.mxu0 %v199
    %1226 = vmatpush1.bf16.msra.mxu0 %v198
    %1227 = vmatprep.subr.bf16.mxu0 0
    %1228 = vmatpush1.bf16.msra.mxu0 0
    %1229 = vmatprep.subr.bf16.mxu0 0
    %1230 = vmatpush1.bf16.msra.mxu0 0
    %1231 = vmatprep.subr.bf16.mxu0 0
    %1232 = vmatpush1.bf16.msra.mxu0 0
    %1233 = vmatprep.subr.bf16.mxu0 0
    %1234 = vmatpush1.bf16.msra.mxu0 0
    %1235 = vmatprep.subr.bf16.mxu0 0
    %1236 = vmatpush1.bf16.msra.mxu0 0
    %1237 = vmatprep.subr.bf16.mxu0 0
    %1238 = vmatpush1.bf16.msra.mxu0 0
    %1239 = vmatprep.subr.bf16.mxu0 0
    %1240 = vmatpush1.bf16.msra.mxu0 0
    %1241 = vmatprep.subr.bf16.mxu0 0
    %1242 = vmatpush1.bf16.msra.mxu0 0
    %1243 = vmatprep.mubr.bf16.mxu0 0
    %1244 = vmatmul.mubr.bf16.gmra.mrb[0].mxu0 %v1169
    %v1245 = vpop.f32.mrb[0].mxu0
    %v1246 = vadd.f32 0.0, %v1245
    %v1247 = vpop.f32.mrb[0].mxu0
    %v1248 = vadd.f32 0.0, %v1247
    %v1249 = vpop.f32.mrb[0].mxu0
    %v1250 = vpop.f32.mrb[0].mxu0
    %1251 = vdwg.mxu0
    %v1256 = vcombine.low %v1205, %v1207
    %v1257 = vcombine.low %v1246, %v1248
    %v1259 = vunpack.c.l.s4 1966171168
    %v1260 = vunpack.c.0.s8 %v1259
    %v1261 = vlaneseq
    %v1262 = vshrl.u32 %v1261, 7
    %v1263 = vsub.s32 %v1260, %v1262
    %v1264 = vrot.slane %v1256, %v1263
    %v1266 = vunpack.c.l.s4 1966171168
    %v1267 = vunpack.c.0.s8 %v1266
    %v1268 = vlaneseq
    %v1269 = vshrl.u32 %v1268, 7
    %v1270 = vsub.s32 %v1267, %v1269
    %v1271 = vrot.slane %v1257, %v1270
    %v1272 = vcombine.low %v1264, %v1271
    %v1274 = vunpack.c.l.s4 1966171168
    %v1275 = vunpack.c.0.s8 %v1274
    %v1276 = vlaneseq
    %v1277 = vshrl.u32 %v1276, 7
    %v1278 = vsub.s32 %v1275, %v1277
    %v1279 = vrot.slane %v1272, %v1278
    %v1281 = vadd.f32 %v1168, %v1279
    %v1282 = vtanh.pop %v1281
    %v1283 = vmul.f32 %v1282, 0.5
    %v1284 = vadd.f32 %v1283, 0.5
    %v1286 = vrot.slane %v1282, 1
    %v1288 = vmul.f32 %v1286, 0.5
    %v1289 = vadd.f32 %v1288, 0.5
    %v1290 = vrot.slane %v1282, 3
    %v1292 = vmul.f32 %v1290, 0.5
    %v1293 = vadd.f32 %v1292, 0.5
    %v1294 = vmul.f32 %v1289, %v1164
    %v1295 = vrot.slane %v1282, 2
    %v1297 = vmul.f32 %v1284, %v1295
    %v1298 = vadd.f32 %v1294, %v1297
    %v1299 = vtanh.pop %v1298
    %v1300 = vmul.f32 %v1293, %v1299
    %1301 = vst [vmem:[#allocation7] sm:$0x1] %v1300
    // Predicated region
    $region18: #{tpu_custom_call.1} parent=1 // pred_check
      _
    $region19: #{tpu_custom_call.1} parent=1 // pred_check_branch
      %1303 = sbr.rel (0) target = $region21
    $region20: #{tpu_custom_call.1} parent=1 // pred_region
      %s1305 = ssub.s32 16, 16
      %1306 = vsyncadd [#allocation4], %s1305
      %s1308 = sshll.u32 [#allocation7], 4
      %s1309 = int_to_ptr.vmem [resolvable:$true] %s1308
      %1311 = dma.vmem_to_hbm [thread:$0]  %s1309, 16, %s2, [#allocation4]
    $region21: #{tpu_custom_call.1} parent=1 // pred_fallthru
      _
    // Predicated region
    $region22: #{tpu_custom_call.1} parent=1 // pred_check
      _
    $region23: #{tpu_custom_call.1} parent=1 // pred_check_branch
      %1313 = sbr.rel (0) target = $region25
    $region24: #{tpu_custom_call.1} parent=1 // pred_region
      %1314 = dma.done [#allocation4], 16
    $region25: #{tpu_custom_call.1} parent=1 // pred_fallthru
      _
    %1315 = vsyncpa [#allocation3], 1
    %1316 = vsyncpa [#allocation6], 1
    %1317 = vsyncpa [#allocation4], 1

</llo_original>
